<compile_context>
chip_gen: v7x
topology: tpu7x:2x2x1
jax: 0.10.0
libtpu: 0.0.40
codegen_flags: <defaults>
</compile_context>

<pallas_src>
import functools

import jax
import jax.numpy as jnp
from jax import lax
from jax.experimental import pallas as pl
from jax.experimental.pallas import tpu as pltpu

_EPS = 1e-5
_SENTINEL = -1e9   # invalid points pushed far away -> never a bin's nearest point
_BIG = 1e30        # init value for the running per-bin min


# ----------------------------------------------------------------------------
# Glue: bilinear resize with align_corners=True (only used if predict / target
# spatial sizes differ, mirroring F.interpolate(..., 'bilinear', True)).
# ----------------------------------------------------------------------------
def _resize_bilinear_align_corners(x, H, W):
    B, C, h, w = x.shape
    if (h, w) == (H, W):
        return x
    ys = jnp.linspace(0.0, h - 1.0, H) if H > 1 else jnp.zeros((H,), jnp.float32)
    xs = jnp.linspace(0.0, w - 1.0, W) if W > 1 else jnp.zeros((W,), jnp.float32)
    y0 = jnp.floor(ys).astype(jnp.int32)
    x0 = jnp.floor(xs).astype(jnp.int32)
    y1 = jnp.minimum(y0 + 1, h - 1)
    x1 = jnp.minimum(x0 + 1, w - 1)
    wy = (ys - y0.astype(jnp.float32)).reshape(1, 1, H, 1)
    wx = (xs - x0.astype(jnp.float32)).reshape(1, 1, 1, W)

    def gather(yi, xi):
        return x[:, :, yi, :][:, :, :, xi]

    v00 = gather(y0, x0)
    v01 = gather(y0, x1)
    v10 = gather(y1, x0)
    v11 = gather(y1, x1)
    top = v00 * (1.0 - wx) + v01 * wx
    bot = v10 * (1.0 - wx) + v11 * wx
    return top * (1.0 - wy) + bot * wy


# ----------------------------------------------------------------------------
# Kernel.  grid = (B, n_split, chunks_per_split); one chunk = n_sub * g_reg
# groups of (8,128) pixels.
#
# Output accumulators (resident across the chunk axis, per (batch, split)):
#   acc_ref : (1, 1, 6, 8, 128) partial-sum planes
#             [0] sum g    [1] sum g^2
#             [2] sum pt_min*valid (target)   [3] valid count (target)
#             [4] sum pt_min*valid (lidar)    [5] valid count (lidar)
#   bm_ref  : (1, 1, 2*n_bins, 8, 128) running min squared distance bin->points
#             rows [0:n_bins] = target, [n_bins:2*n_bins] = lidar
# ----------------------------------------------------------------------------
def _loss_kernel(cen_ref, pred_ref, targ_ref, lid_ref, acc_ref, bm_ref,
                 *, n_sub, g_reg, n_bins, d_min):
    b = pl.program_id(0)
    c = pl.program_id(2)

    @pl.when(c == 0)
    def _init():
        acc_ref[...] = jnp.zeros(acc_ref.shape, jnp.float32)
        bm_ref[...] = jnp.full(bm_ref.shape, _BIG, dtype=jnp.float32)

    zero = jnp.zeros((8, 128), jnp.float32)
    sil_s = zero          # sum g over the chunk
    sil_s2 = zero         # sum g^2
    pt_s = [zero, zero]   # sum of per-point min distances (target / lidar)
    cnt_s = [zero, zero]  # valid-point counts (target / lidar)

    for sub in range(n_sub):                       # static, small
        base = sub * g_reg

        # -------------------- SILog partial sums (EUP logs) -----------------
        for g in range(g_reg):                     # unrolled register tile
            p = pred_ref[0, base + g]
            t = targ_ref[0, base + g]
            m = jnp.logical_and(p >= d_min, t >= d_min).astype(jnp.float32)
            gg = jnp.log(p * m + _EPS) - jnp.log(t * m + _EPS)
            sil_s = sil_s + gg
            sil_s2 = sil_s2 + gg * gg

        # -------------------- chamfer: bin-outer / group-inner --------------
        # one direction at a time so only ~2*g_reg vregs are live.
        for slot, src_ref in ((0, targ_ref), (1, lid_ref)):
            pts = [src_ref[0, base + g] for g in range(g_reg)]
            vf = [(p >= d_min).astype(jnp.float32) for p in pts]
            pm = [jnp.where(p >= d_min, p, jnp.float32(_SENTINEL)) for p in pts]
            lo = slot * n_bins

            def bin_body(i, ptmins, pm=pm, lo=lo):
                cval = cen_ref[b, i]               # SMEM scalar -> splat
                binmin = None
                new = []
                for g in range(g_reg):             # unrolled: pure VALU
                    d = cval - pm[g]
                    d = d * d
                    binmin = d if binmin is None else jnp.minimum(binmin, d)
                    new.append(jnp.minimum(ptmins[g], d))
                # one read-min-write of bm_ref per bin per sub-chunk
                bm_ref[0, 0, lo + i] = jnp.minimum(bm_ref[0, 0, lo + i], binmin)
                return tuple(new)

            init = tuple(jnp.full((8, 128), _BIG, jnp.float32)
                         for _ in range(g_reg))
            ptmins = lax.fori_loop(0, n_bins, bin_body, init)

            for g in range(g_reg):
                pt_s[slot] = pt_s[slot] + ptmins[g] * vf[g]
                cnt_s[slot] = cnt_s[slot] + vf[g]

    # single accumulator write-back per chunk
    acc_ref[0, 0, 0] += sil_s
    acc_ref[0, 0, 1] += sil_s2
    acc_ref[0, 0, 2] += pt_s[0]
    acc_ref[0, 0, 3] += cnt_s[0]
    acc_ref[0, 0, 4] += pt_s[1]
    acc_ref[0, 0, 5] += cnt_s[1]


# ----------------------------------------------------------------------------
# Wrapper
# ----------------------------------------------------------------------------
def loss_functions(predict, centers, target, lidar, *,
                   depth_min=0.001, lamb=0.85,
                   alpha=10.0, beta1=0.1, beta2=0.001):
    # torch reference only checks size(3)
    if predict.shape[3] != target.shape[3]:
        predict = _resize_bilinear_align_corners(
            predict, target.shape[2], target.shape[3])

    B, C, H, W = target.shape
    N = C * H * W

    if centers.ndim == 1:
        centers = jnp.broadcast_to(centers[None, :], (B, centers.shape[0]))
    n_bins = centers.shape[1]

    # ---- chunking: driven by grid-step overhead, not VMEM capacity ----------
    G_REG = 8                                   # register tile (groups)
    n_grp = -(-N // 1024)                       # number of (8,128) pixel groups
    n_grp8 = -(-n_grp // G_REG) * G_REG         # pad to register tile
    G_CHUNK = min(n_grp8, 32)                   # groups per grid step (32K px)
    num_chunks = -(-n_grp8 // G_CHUNK)

    # split chunk axis so both TensorCores get work when B alone can't (v7x)
    n_split = 2 if (B % 2 == 1 and num_chunks >= 2) else 1
    num_chunks = -(-num_chunks // n_split) * n_split
    chunks_per_split = num_chunks // n_split
    n_grp_pad = num_chunks * G_CHUNK
    N_pad = n_grp_pad * 1024

    def prep(x):
        x = x.astype(jnp.float32).reshape(B, -1)
        if x.shape[1] != N_pad:
            x = jnp.pad(x, ((0, 0), (0, N_pad - x.shape[1])))
        return x.reshape(B, n_grp_pad, 8, 128)

    pred4 = prep(predict)
    targ4 = prep(target)
    lid4 = prep(lidar)
    cen2 = centers.astype(jnp.float32)          # (B, n_bins) -> SMEM prefetch

    # ---- VMEM limit from the actual working set + headroom ------------------
    blk_bytes = G_CHUNK * 8 * 128 * 4
    out_bytes = (6 + 2 * n_bins) * 8 * 128 * 4
    vmem_limit = int(3 * blk_bytes * 2 + out_bytes * 2 + (12 << 20))

    kernel = functools.partial(
        _loss_kernel, n_sub=G_CHUNK // G_REG, g_reg=G_REG,
        n_bins=n_bins, d_min=float(depth_min))

    acc, bm = pl.pallas_call(
        kernel,
        out_shape=(
            jax.ShapeDtypeStruct((B, n_split, 6, 8, 128), jnp.float32),
            jax.ShapeDtypeStruct((B, n_split, 2 * n_bins, 8, 128), jnp.float32),
        ),
        grid_spec=pltpu.PrefetchScalarGridSpec(
            num_scalar_prefetch=1,
            grid=(B, n_split, chunks_per_split),
            in_specs=[
                pl.BlockSpec((1, G_CHUNK, 8, 128),
                             lambda b, s, c, cen: (b, s * chunks_per_split + c, 0, 0)),
                pl.BlockSpec((1, G_CHUNK, 8, 128),
                             lambda b, s, c, cen: (b, s * chunks_per_split + c, 0, 0)),
                pl.BlockSpec((1, G_CHUNK, 8, 128),
                             lambda b, s, c, cen: (b, s * chunks_per_split + c, 0, 0)),
            ],
            out_specs=[
                pl.BlockSpec((1, 1, 6, 8, 128),
                             lambda b, s, c, cen: (b, s, 0, 0, 0)),
                pl.BlockSpec((1, 1, 2 * n_bins, 8, 128),
                             lambda b, s, c, cen: (b, s, 0, 0, 0)),
            ],
        ),
        compiler_params=pltpu.CompilerParams(
            dimension_semantics=("parallel", "parallel", "arbitrary"),
            vmem_limit_bytes=vmem_limit),
    )(cen2, pred4, targ4, lid4)

    # ---- tiny scalar finalize in plain JAX (O(B*n_bins)) --------------------
    sums = jnp.sum(acc, axis=(1, 3, 4))                        # (B, 6)
    sg = jnp.sum(sums[:, 0])
    sg2 = jnp.sum(sums[:, 1])
    # torch computes mean/var of g over ALL pixels (masked pixels contribute 0)
    n = jnp.float32(B * N)
    mean_g = sg / n
    var_g = (sg2 - sg * sg / n) / (n - 1.0)                    # torch.var is unbiased
    var_g = jnp.maximum(var_g, 0.0)                            # guard fp cancellation
    sil = jnp.sqrt(var_g + (1.0 - lamb) * mean_g * mean_g)

    bin_min = jnp.min(bm.reshape(B, n_split, 2, n_bins, 8, 128),
                      axis=(1, 4, 5))                          # (B, 2, n_bins)
    chx = jnp.mean(bin_min, axis=2)                            # (B, 2) bins -> points

    def chamfer(chx_b, sy_b, cnt_b):
        has = cnt_b > 0.0                                      # guard empty point sets
        chy = jnp.where(has, sy_b / jnp.maximum(cnt_b, 1.0), 0.0)
        return jnp.mean(jnp.where(has, chx_b, 0.0) + chy)      # batch_reduction="mean"

    ch_t = chamfer(chx[:, 0], sums[:, 2], sums[:, 3])
    ch_l = chamfer(chx[:, 1], sums[:, 4], sums[:, 5])

    return alpha * sil + beta1 * ch_t + beta2 * ch_l


if __name__ == "__main__":
    key = jax.random.PRNGKey(0)
    B, C, H, W = 2, 1, 16, 16
    n_bins = 128

    k1, k2, k3, k4 = jax.random.split(key, 4)
    predict = jax.random.uniform(k1, (B, C, H, W), jnp.float32, 0.01, 10.0)
    target = jax.random.uniform(k2, (B, C, H, W), jnp.float32, 0.0, 10.0)
    # sparse lidar: ~30% of pixels valid, rest zero (below depth_min)
    lidar_dense = jax.random.uniform(k3, (B, C, H, W), jnp.float32, 0.5, 80.0)
    keep = jax.random.uniform(k4, (B, C, H, W)) < 0.3
    lidar = jnp.where(keep, lidar_dense, 0.0)

    centers = jnp.linspace(0.1, 10.0, n_bins, dtype=jnp.float32)
    centers = jnp.broadcast_to(centers[None, :], (B, n_bins))

    loss = loss_functions(predict, centers, target, lidar)
    jax.block_until_ready(loss)
    print("KERNEL_OK")
</pallas_src>

<mosaic_0001>
module attributes {stable_mosaic.version = 11 : i64} {
  func.func @_loss_kernel(%arg0: i32, %arg1: i32, %arg2: i32, %arg3: memref<2x128xf32, #tpu.memory_space<smem>>, %arg4: memref<1x8x8x128xf32, #tpu.memory_space<vmem>>, %arg5: memref<1x8x8x128xf32, #tpu.memory_space<vmem>>, %arg6: memref<1x8x8x128xf32, #tpu.memory_space<vmem>>, %arg7: memref<1x1x6x8x128xf32, #tpu.memory_space<vmem>>, %arg8: memref<1x1x256x8x128xf32, #tpu.memory_space<vmem>>) attributes {dimension_semantics = [#tpu.dimension_semantics<parallel>, #tpu.dimension_semantics<parallel>, #tpu.dimension_semantics<arbitrary>], iteration_bounds = array<i64: 2, 1, 1>, scalar_prefetch = 1 : i64, scratch_operands = 0 : i64, tpu.core_type = #tpu.core_type<tc>, window_params = [{transform_indices = @transform_0, window_bounds = array<i64: 1, 8, 8, 128>}, {transform_indices = @transform_1, window_bounds = array<i64: 1, 8, 8, 128>}, {transform_indices = @transform_2, window_bounds = array<i64: 1, 8, 8, 128>}, {transform_indices = @transform_3, window_bounds = array<i64: 1, 1, 6, 8, 128>}, {transform_indices = @transform_4, window_bounds = array<i64: 1, 1, 256, 8, 128>}]} {
    %c0_i32 = arith.constant 0 : i32
    %0 = arith.cmpi eq, %arg2, %c0_i32 : i32
    %1 = arith.extui %0 : i1 to i32
    %c0_i32_0 = arith.constant 0 : i32
    %2 = arith.cmpi ne, %1, %c0_i32_0 : i32
    scf.if %2 {
      %cst_283 = arith.constant 0.000000e+00 : f32
      %452 = vector.broadcast %cst_283 : f32 to vector<1x1x6x8x128xf32>
      %c0_284 = arith.constant 0 : index
      %c0_285 = arith.constant 0 : index
      %c0_286 = arith.constant 0 : index
      %c0_287 = arith.constant 0 : index
      %c0_288 = arith.constant 0 : index
      %453 = vector.load %arg7[%c0_284, %c0_285, %c0_286, %c0_287, %c0_288] : memref<1x1x6x8x128xf32, #tpu.memory_space<vmem>>, vector<1x1x6x8x128xf32>
      tpu.vector_store %arg7[%c0_284, %c0_285, %c0_286, %c0_287, %c0_288], %452 {strides = array<i32>} : memref<1x1x6x8x128xf32, #tpu.memory_space<vmem>>, vector<1x1x6x8x128xf32>,
      %cst_289 = arith.constant 1.000000e+30 : f32
      %454 = vector.broadcast %cst_289 : f32 to vector<1x1x256x8x128xf32>
      %c0_290 = arith.constant 0 : index
      %c0_291 = arith.constant 0 : index
      %c0_292 = arith.constant 0 : index
      %c0_293 = arith.constant 0 : index
      %c0_294 = arith.constant 0 : index
      %455 = vector.load %arg8[%c0_290, %c0_291, %c0_292, %c0_293, %c0_294] : memref<1x1x256x8x128xf32, #tpu.memory_space<vmem>>, vector<1x1x256x8x128xf32>
      tpu.vector_store %arg8[%c0_290, %c0_291, %c0_292, %c0_293, %c0_294], %454 {strides = array<i32>} : memref<1x1x256x8x128xf32, #tpu.memory_space<vmem>>, vector<1x1x256x8x128xf32>,
    } else {
    }
    %cst = arith.constant 0.000000e+00 : f32
    %3 = vector.broadcast %cst : f32 to vector<8x128xf32>
    %c0 = arith.constant 0 : index
    %c0_1 = arith.constant 0 : index
    %c0_2 = arith.constant 0 : index
    %c0_3 = arith.constant 0 : index
    %4 = vector.load %arg4[%c0, %c0_1, %c0_2, %c0_3] : memref<1x8x8x128xf32, #tpu.memory_space<vmem>>, vector<1x1x8x128xf32>
    %5 = vector.shape_cast %4 : vector<1x1x8x128xf32> to vector<8x128xf32>
    %c0_4 = arith.constant 0 : index
    %c0_5 = arith.constant 0 : index
    %c0_6 = arith.constant 0 : index
    %c0_7 = arith.constant 0 : index
    %6 = vector.load %arg5[%c0_4, %c0_5, %c0_6, %c0_7] : memref<1x8x8x128xf32, #tpu.memory_space<vmem>>, vector<1x1x8x128xf32>
    %7 = vector.shape_cast %6 : vector<1x1x8x128xf32> to vector<8x128xf32>
    %cst_8 = arith.constant 1.000000e-03 : f32
    %8 = vector.broadcast %cst_8 : f32 to vector<8x128xf32>
    %9 = arith.cmpf oge, %5, %8 : vector<8x128xf32>
    %cst_9 = arith.constant 1.000000e-03 : f32
    %10 = vector.broadcast %cst_9 : f32 to vector<8x128xf32>
    %11 = arith.cmpf oge, %7, %10 : vector<8x128xf32>
    %12 = arith.andi %9, %11 : vector<8x128xi1>
    %13 = arith.extui %12 : vector<8x128xi1> to vector<8x128xi32>
    %14 = arith.sitofp %13 : vector<8x128xi32> to vector<8x128xf32>
    %15 = arith.mulf %5, %14 : vector<8x128xf32>
    %cst_10 = arith.constant 9.99999974E-6 : f32
    %16 = vector.broadcast %cst_10 : f32 to vector<8x128xf32>
    %17 = arith.addf %15, %16 : vector<8x128xf32>
    %18 = math.log %17 : vector<8x128xf32>
    %19 = arith.mulf %7, %14 : vector<8x128xf32>
    %cst_11 = arith.constant 9.99999974E-6 : f32
    %20 = vector.broadcast %cst_11 : f32 to vector<8x128xf32>
    %21 = arith.addf %19, %20 : vector<8x128xf32>
    %22 = math.log %21 : vector<8x128xf32>
    %23 = arith.subf %18, %22 : vector<8x128xf32>
    %24 = arith.addf %3, %23 : vector<8x128xf32>
    %25 = arith.mulf %23, %23 : vector<8x128xf32>
    %26 = arith.addf %3, %25 : vector<8x128xf32>
    %c0_12 = arith.constant 0 : index
    %c1 = arith.constant 1 : index
    %c0_13 = arith.constant 0 : index
    %c0_14 = arith.constant 0 : index
    %27 = vector.load %arg4[%c0_12, %c1, %c0_13, %c0_14] : memref<1x8x8x128xf32, #tpu.memory_space<vmem>>, vector<1x1x8x128xf32>
    %28 = vector.shape_cast %27 : vector<1x1x8x128xf32> to vector<8x128xf32>
    %c0_15 = arith.constant 0 : index
    %c1_16 = arith.constant 1 : index
    %c0_17 = arith.constant 0 : index
    %c0_18 = arith.constant 0 : index
    %29 = vector.load %arg5[%c0_15, %c1_16, %c0_17, %c0_18] : memref<1x8x8x128xf32, #tpu.memory_space<vmem>>, vector<1x1x8x128xf32>
    %30 = vector.shape_cast %29 : vector<1x1x8x128xf32> to vector<8x128xf32>
    %cst_19 = arith.constant 1.000000e-03 : f32
    %31 = vector.broadcast %cst_19 : f32 to vector<8x128xf32>
    %32 = arith.cmpf oge, %28, %31 : vector<8x128xf32>
    %cst_20 = arith.constant 1.000000e-03 : f32
    %33 = vector.broadcast %cst_20 : f32 to vector<8x128xf32>
    %34 = arith.cmpf oge, %30, %33 : vector<8x128xf32>
    %35 = arith.andi %32, %34 : vector<8x128xi1>
    %36 = arith.extui %35 : vector<8x128xi1> to vector<8x128xi32>
    %37 = arith.sitofp %36 : vector<8x128xi32> to vector<8x128xf32>
    %38 = arith.mulf %28, %37 : vector<8x128xf32>
    %cst_21 = arith.constant 9.99999974E-6 : f32
    %39 = vector.broadcast %cst_21 : f32 to vector<8x128xf32>
    %40 = arith.addf %38, %39 : vector<8x128xf32>
    %41 = math.log %40 : vector<8x128xf32>
    %42 = arith.mulf %30, %37 : vector<8x128xf32>
    %cst_22 = arith.constant 9.99999974E-6 : f32
    %43 = vector.broadcast %cst_22 : f32 to vector<8x128xf32>
    %44 = arith.addf %42, %43 : vector<8x128xf32>
    %45 = math.log %44 : vector<8x128xf32>
    %46 = arith.subf %41, %45 : vector<8x128xf32>
    %47 = arith.addf %24, %46 : vector<8x128xf32>
    %48 = arith.mulf %46, %46 : vector<8x128xf32>
    %49 = arith.addf %26, %48 : vector<8x128xf32>
    %c0_23 = arith.constant 0 : index
    %c2 = arith.constant 2 : index
    %c0_24 = arith.constant 0 : index
    %c0_25 = arith.constant 0 : index
    %50 = vector.load %arg4[%c0_23, %c2, %c0_24, %c0_25] : memref<1x8x8x128xf32, #tpu.memory_space<vmem>>, vector<1x1x8x128xf32>
    %51 = vector.shape_cast %50 : vector<1x1x8x128xf32> to vector<8x128xf32>
    %c0_26 = arith.constant 0 : index
    %c2_27 = arith.constant 2 : index
    %c0_28 = arith.constant 0 : index
    %c0_29 = arith.constant 0 : index
    %52 = vector.load %arg5[%c0_26, %c2_27, %c0_28, %c0_29] : memref<1x8x8x128xf32, #tpu.memory_space<vmem>>, vector<1x1x8x128xf32>
    %53 = vector.shape_cast %52 : vector<1x1x8x128xf32> to vector<8x128xf32>
    %cst_30 = arith.constant 1.000000e-03 : f32
    %54 = vector.broadcast %cst_30 : f32 to vector<8x128xf32>
    %55 = arith.cmpf oge, %51, %54 : vector<8x128xf32>
    %cst_31 = arith.constant 1.000000e-03 : f32
    %56 = vector.broadcast %cst_31 : f32 to vector<8x128xf32>
    %57 = arith.cmpf oge, %53, %56 : vector<8x128xf32>
    %58 = arith.andi %55, %57 : vector<8x128xi1>
    %59 = arith.extui %58 : vector<8x128xi1> to vector<8x128xi32>
    %60 = arith.sitofp %59 : vector<8x128xi32> to vector<8x128xf32>
    %61 = arith.mulf %51, %60 : vector<8x128xf32>
    %cst_32 = arith.constant 9.99999974E-6 : f32
    %62 = vector.broadcast %cst_32 : f32 to vector<8x128xf32>
    %63 = arith.addf %61, %62 : vector<8x128xf32>
    %64 = math.log %63 : vector<8x128xf32>
    %65 = arith.mulf %53, %60 : vector<8x128xf32>
    %cst_33 = arith.constant 9.99999974E-6 : f32
    %66 = vector.broadcast %cst_33 : f32 to vector<8x128xf32>
    %67 = arith.addf %65, %66 : vector<8x128xf32>
    %68 = math.log %67 : vector<8x128xf32>
    %69 = arith.subf %64, %68 : vector<8x128xf32>
    %70 = arith.addf %47, %69 : vector<8x128xf32>
    %71 = arith.mulf %69, %69 : vector<8x128xf32>
    %72 = arith.addf %49, %71 : vector<8x128xf32>
    %c0_34 = arith.constant 0 : index
    %c3 = arith.constant 3 : index
    %c0_35 = arith.constant 0 : index
    %c0_36 = arith.constant 0 : index
    %73 = vector.load %arg4[%c0_34, %c3, %c0_35, %c0_36] : memref<1x8x8x128xf32, #tpu.memory_space<vmem>>, vector<1x1x8x128xf32>
    %74 = vector.shape_cast %73 : vector<1x1x8x128xf32> to vector<8x128xf32>
    %c0_37 = arith.constant 0 : index
    %c3_38 = arith.constant 3 : index
    %c0_39 = arith.constant 0 : index
    %c0_40 = arith.constant 0 : index
    %75 = vector.load %arg5[%c0_37, %c3_38, %c0_39, %c0_40] : memref<1x8x8x128xf32, #tpu.memory_space<vmem>>, vector<1x1x8x128xf32>
    %76 = vector.shape_cast %75 : vector<1x1x8x128xf32> to vector<8x128xf32>
    %cst_41 = arith.constant 1.000000e-03 : f32
    %77 = vector.broadcast %cst_41 : f32 to vector<8x128xf32>
    %78 = arith.cmpf oge, %74, %77 : vector<8x128xf32>
    %cst_42 = arith.constant 1.000000e-03 : f32
    %79 = vector.broadcast %cst_42 : f32 to vector<8x128xf32>
    %80 = arith.cmpf oge, %76, %79 : vector<8x128xf32>
    %81 = arith.andi %78, %80 : vector<8x128xi1>
    %82 = arith.extui %81 : vector<8x128xi1> to vector<8x128xi32>
    %83 = arith.sitofp %82 : vector<8x128xi32> to vector<8x128xf32>
    %84 = arith.mulf %74, %83 : vector<8x128xf32>
    %cst_43 = arith.constant 9.99999974E-6 : f32
    %85 = vector.broadcast %cst_43 : f32 to vector<8x128xf32>
    %86 = arith.addf %84, %85 : vector<8x128xf32>
    %87 = math.log %86 : vector<8x128xf32>
    %88 = arith.mulf %76, %83 : vector<8x128xf32>
    %cst_44 = arith.constant 9.99999974E-6 : f32
    %89 = vector.broadcast %cst_44 : f32 to vector<8x128xf32>
    %90 = arith.addf %88, %89 : vector<8x128xf32>
    %91 = math.log %90 : vector<8x128xf32>
    %92 = arith.subf %87, %91 : vector<8x128xf32>
    %93 = arith.addf %70, %92 : vector<8x128xf32>
    %94 = arith.mulf %92, %92 : vector<8x128xf32>
    %95 = arith.addf %72, %94 : vector<8x128xf32>
    %c0_45 = arith.constant 0 : index
    %c4 = arith.constant 4 : index
    %c0_46 = arith.constant 0 : index
    %c0_47 = arith.constant 0 : index
    %96 = vector.load %arg4[%c0_45, %c4, %c0_46, %c0_47] : memref<1x8x8x128xf32, #tpu.memory_space<vmem>>, vector<1x1x8x128xf32>
    %97 = vector.shape_cast %96 : vector<1x1x8x128xf32> to vector<8x128xf32>
    %c0_48 = arith.constant 0 : index
    %c4_49 = arith.constant 4 : index
    %c0_50 = arith.constant 0 : index
    %c0_51 = arith.constant 0 : index
    %98 = vector.load %arg5[%c0_48, %c4_49, %c0_50, %c0_51] : memref<1x8x8x128xf32, #tpu.memory_space<vmem>>, vector<1x1x8x128xf32>
    %99 = vector.shape_cast %98 : vector<1x1x8x128xf32> to vector<8x128xf32>
    %cst_52 = arith.constant 1.000000e-03 : f32
    %100 = vector.broadcast %cst_52 : f32 to vector<8x128xf32>
    %101 = arith.cmpf oge, %97, %100 : vector<8x128xf32>
    %cst_53 = arith.constant 1.000000e-03 : f32
    %102 = vector.broadcast %cst_53 : f32 to vector<8x128xf32>
    %103 = arith.cmpf oge, %99, %102 : vector<8x128xf32>
    %104 = arith.andi %101, %103 : vector<8x128xi1>
    %105 = arith.extui %104 : vector<8x128xi1> to vector<8x128xi32>
    %106 = arith.sitofp %105 : vector<8x128xi32> to vector<8x128xf32>
    %107 = arith.mulf %97, %106 : vector<8x128xf32>
    %cst_54 = arith.constant 9.99999974E-6 : f32
    %108 = vector.broadcast %cst_54 : f32 to vector<8x128xf32>
    %109 = arith.addf %107, %108 : vector<8x128xf32>
    %110 = math.log %109 : vector<8x128xf32>
    %111 = arith.mulf %99, %106 : vector<8x128xf32>
    %cst_55 = arith.constant 9.99999974E-6 : f32
    %112 = vector.broadcast %cst_55 : f32 to vector<8x128xf32>
    %113 = arith.addf %111, %112 : vector<8x128xf32>
    %114 = math.log %113 : vector<8x128xf32>
    %115 = arith.subf %110, %114 : vector<8x128xf32>
    %116 = arith.addf %93, %115 : vector<8x128xf32>
    %117 = arith.mulf %115, %115 : vector<8x128xf32>
    %118 = arith.addf %95, %117 : vector<8x128xf32>
    %c0_56 = arith.constant 0 : index
    %c5 = arith.constant 5 : index
    %c0_57 = arith.constant 0 : index
    %c0_58 = arith.constant 0 : index
    %119 = vector.load %arg4[%c0_56, %c5, %c0_57, %c0_58] : memref<1x8x8x128xf32, #tpu.memory_space<vmem>>, vector<1x1x8x128xf32>
    %120 = vector.shape_cast %119 : vector<1x1x8x128xf32> to vector<8x128xf32>
    %c0_59 = arith.constant 0 : index
    %c5_60 = arith.constant 5 : index
    %c0_61 = arith.constant 0 : index
    %c0_62 = arith.constant 0 : index
    %121 = vector.load %arg5[%c0_59, %c5_60, %c0_61, %c0_62] : memref<1x8x8x128xf32, #tpu.memory_space<vmem>>, vector<1x1x8x128xf32>
    %122 = vector.shape_cast %121 : vector<1x1x8x128xf32> to vector<8x128xf32>
    %cst_63 = arith.constant 1.000000e-03 : f32
    %123 = vector.broadcast %cst_63 : f32 to vector<8x128xf32>
    %124 = arith.cmpf oge, %120, %123 : vector<8x128xf32>
    %cst_64 = arith.constant 1.000000e-03 : f32
    %125 = vector.broadcast %cst_64 : f32 to vector<8x128xf32>
    %126 = arith.cmpf oge, %122, %125 : vector<8x128xf32>
    %127 = arith.andi %124, %126 : vector<8x128xi1>
    %128 = arith.extui %127 : vector<8x128xi1> to vector<8x128xi32>
    %129 = arith.sitofp %128 : vector<8x128xi32> to vector<8x128xf32>
    %130 = arith.mulf %120, %129 : vector<8x128xf32>
    %cst_65 = arith.constant 9.99999974E-6 : f32
    %131 = vector.broadcast %cst_65 : f32 to vector<8x128xf32>
    %132 = arith.addf %130, %131 : vector<8x128xf32>
    %133 = math.log %132 : vector<8x128xf32>
    %134 = arith.mulf %122, %129 : vector<8x128xf32>
    %cst_66 = arith.constant 9.99999974E-6 : f32
    %135 = vector.broadcast %cst_66 : f32 to vector<8x128xf32>
    %136 = arith.addf %134, %135 : vector<8x128xf32>
    %137 = math.log %136 : vector<8x128xf32>
    %138 = arith.subf %133, %137 : vector<8x128xf32>
    %139 = arith.addf %116, %138 : vector<8x128xf32>
    %140 = arith.mulf %138, %138 : vector<8x128xf32>
    %141 = arith.addf %118, %140 : vector<8x128xf32>
    %c0_67 = arith.constant 0 : index
    %c6 = arith.constant 6 : index
    %c0_68 = arith.constant 0 : index
    %c0_69 = arith.constant 0 : index
    %142 = vector.load %arg4[%c0_67, %c6, %c0_68, %c0_69] : memref<1x8x8x128xf32, #tpu.memory_space<vmem>>, vector<1x1x8x128xf32>
    %143 = vector.shape_cast %142 : vector<1x1x8x128xf32> to vector<8x128xf32>
    %c0_70 = arith.constant 0 : index
    %c6_71 = arith.constant 6 : index
    %c0_72 = arith.constant 0 : index
    %c0_73 = arith.constant 0 : index
    %144 = vector.load %arg5[%c0_70, %c6_71, %c0_72, %c0_73] : memref<1x8x8x128xf32, #tpu.memory_space<vmem>>, vector<1x1x8x128xf32>
    %145 = vector.shape_cast %144 : vector<1x1x8x128xf32> to vector<8x128xf32>
    %cst_74 = arith.constant 1.000000e-03 : f32
    %146 = vector.broadcast %cst_74 : f32 to vector<8x128xf32>
    %147 = arith.cmpf oge, %143, %146 : vector<8x128xf32>
    %cst_75 = arith.constant 1.000000e-03 : f32
    %148 = vector.broadcast %cst_75 : f32 to vector<8x128xf32>
    %149 = arith.cmpf oge, %145, %148 : vector<8x128xf32>
    %150 = arith.andi %147, %149 : vector<8x128xi1>
    %151 = arith.extui %150 : vector<8x128xi1> to vector<8x128xi32>
    %152 = arith.sitofp %151 : vector<8x128xi32> to vector<8x128xf32>
    %153 = arith.mulf %143, %152 : vector<8x128xf32>
    %cst_76 = arith.constant 9.99999974E-6 : f32
    %154 = vector.broadcast %cst_76 : f32 to vector<8x128xf32>
    %155 = arith.addf %153, %154 : vector<8x128xf32>
    %156 = math.log %155 : vector<8x128xf32>
    %157 = arith.mulf %145, %152 : vector<8x128xf32>
    %cst_77 = arith.constant 9.99999974E-6 : f32
    %158 = vector.broadcast %cst_77 : f32 to vector<8x128xf32>
    %159 = arith.addf %157, %158 : vector<8x128xf32>
    %160 = math.log %159 : vector<8x128xf32>
    %161 = arith.subf %156, %160 : vector<8x128xf32>
    %162 = arith.addf %139, %161 : vector<8x128xf32>
    %163 = arith.mulf %161, %161 : vector<8x128xf32>
    %164 = arith.addf %141, %163 : vector<8x128xf32>
    %c0_78 = arith.constant 0 : index
    %c7 = arith.constant 7 : index
    %c0_79 = arith.constant 0 : index
    %c0_80 = arith.constant 0 : index
    %165 = vector.load %arg4[%c0_78, %c7, %c0_79, %c0_80] : memref<1x8x8x128xf32, #tpu.memory_space<vmem>>, vector<1x1x8x128xf32>
    %166 = vector.shape_cast %165 : vector<1x1x8x128xf32> to vector<8x128xf32>
    %c0_81 = arith.constant 0 : index
    %c7_82 = arith.constant 7 : index
    %c0_83 = arith.constant 0 : index
    %c0_84 = arith.constant 0 : index
    %167 = vector.load %arg5[%c0_81, %c7_82, %c0_83, %c0_84] : memref<1x8x8x128xf32, #tpu.memory_space<vmem>>, vector<1x1x8x128xf32>
    %168 = vector.shape_cast %167 : vector<1x1x8x128xf32> to vector<8x128xf32>
    %cst_85 = arith.constant 1.000000e-03 : f32
    %169 = vector.broadcast %cst_85 : f32 to vector<8x128xf32>
    %170 = arith.cmpf oge, %166, %169 : vector<8x128xf32>
    %cst_86 = arith.constant 1.000000e-03 : f32
    %171 = vector.broadcast %cst_86 : f32 to vector<8x128xf32>
    %172 = arith.cmpf oge, %168, %171 : vector<8x128xf32>
    %173 = arith.andi %170, %172 : vector<8x128xi1>
    %174 = arith.extui %173 : vector<8x128xi1> to vector<8x128xi32>
    %175 = arith.sitofp %174 : vector<8x128xi32> to vector<8x128xf32>
    %176 = arith.mulf %166, %175 : vector<8x128xf32>
    %cst_87 = arith.constant 9.99999974E-6 : f32
    %177 = vector.broadcast %cst_87 : f32 to vector<8x128xf32>
    %178 = arith.addf %176, %177 : vector<8x128xf32>
    %179 = math.log %178 : vector<8x128xf32>
    %180 = arith.mulf %168, %175 : vector<8x128xf32>
    %cst_88 = arith.constant 9.99999974E-6 : f32
    %181 = vector.broadcast %cst_88 : f32 to vector<8x128xf32>
    %182 = arith.addf %180, %181 : vector<8x128xf32>
    %183 = math.log %182 : vector<8x128xf32>
    %184 = arith.subf %179, %183 : vector<8x128xf32>
    %185 = arith.addf %162, %184 : vector<8x128xf32>
    %186 = arith.mulf %184, %184 : vector<8x128xf32>
    %187 = arith.addf %164, %186 : vector<8x128xf32>
    %c0_89 = arith.constant 0 : index
    %c0_90 = arith.constant 0 : index
    %c0_91 = arith.constant 0 : index
    %c0_92 = arith.constant 0 : index
    %188 = vector.load %arg5[%c0_89, %c0_90, %c0_91, %c0_92] : memref<1x8x8x128xf32, #tpu.memory_space<vmem>>, vector<1x1x8x128xf32>
    %189 = vector.shape_cast %188 : vector<1x1x8x128xf32> to vector<8x128xf32>
    %c0_93 = arith.constant 0 : index
    %c1_94 = arith.constant 1 : index
    %c0_95 = arith.constant 0 : index
    %c0_96 = arith.constant 0 : index
    %190 = vector.load %arg5[%c0_93, %c1_94, %c0_95, %c0_96] : memref<1x8x8x128xf32, #tpu.memory_space<vmem>>, vector<1x1x8x128xf32>
    %191 = vector.shape_cast %190 : vector<1x1x8x128xf32> to vector<8x128xf32>
    %c0_97 = arith.constant 0 : index
    %c2_98 = arith.constant 2 : index
    %c0_99 = arith.constant 0 : index
    %c0_100 = arith.constant 0 : index
    %192 = vector.load %arg5[%c0_97, %c2_98, %c0_99, %c0_100] : memref<1x8x8x128xf32, #tpu.memory_space<vmem>>, vector<1x1x8x128xf32>
    %193 = vector.shape_cast %192 : vector<1x1x8x128xf32> to vector<8x128xf32>
    %c0_101 = arith.constant 0 : index
    %c3_102 = arith.constant 3 : index
    %c0_103 = arith.constant 0 : index
    %c0_104 = arith.constant 0 : index
    %194 = vector.load %arg5[%c0_101, %c3_102, %c0_103, %c0_104] : memref<1x8x8x128xf32, #tpu.memory_space<vmem>>, vector<1x1x8x128xf32>
    %195 = vector.shape_cast %194 : vector<1x1x8x128xf32> to vector<8x128xf32>
    %c0_105 = arith.constant 0 : index
    %c4_106 = arith.constant 4 : index
    %c0_107 = arith.constant 0 : index
    %c0_108 = arith.constant 0 : index
    %196 = vector.load %arg5[%c0_105, %c4_106, %c0_107, %c0_108] : memref<1x8x8x128xf32, #tpu.memory_space<vmem>>, vector<1x1x8x128xf32>
    %197 = vector.shape_cast %196 : vector<1x1x8x128xf32> to vector<8x128xf32>
    %c0_109 = arith.constant 0 : index
    %c5_110 = arith.constant 5 : index
    %c0_111 = arith.constant 0 : index
    %c0_112 = arith.constant 0 : index
    %198 = vector.load %arg5[%c0_109, %c5_110, %c0_111, %c0_112] : memref<1x8x8x128xf32, #tpu.memory_space<vmem>>, vector<1x1x8x128xf32>
    %199 = vector.shape_cast %198 : vector<1x1x8x128xf32> to vector<8x128xf32>
    %c0_113 = arith.constant 0 : index
    %c6_114 = arith.constant 6 : index
    %c0_115 = arith.constant 0 : index
    %c0_116 = arith.constant 0 : index
    %200 = vector.load %arg5[%c0_113, %c6_114, %c0_115, %c0_116] : memref<1x8x8x128xf32, #tpu.memory_space<vmem>>, vector<1x1x8x128xf32>
    %201 = vector.shape_cast %200 : vector<1x1x8x128xf32> to vector<8x128xf32>
    %c0_117 = arith.constant 0 : index
    %c7_118 = arith.constant 7 : index
    %c0_119 = arith.constant 0 : index
    %c0_120 = arith.constant 0 : index
    %202 = vector.load %arg5[%c0_117, %c7_118, %c0_119, %c0_120] : memref<1x8x8x128xf32, #tpu.memory_space<vmem>>, vector<1x1x8x128xf32>
    %203 = vector.shape_cast %202 : vector<1x1x8x128xf32> to vector<8x128xf32>
    %cst_121 = arith.constant 1.000000e-03 : f32
    %204 = vector.broadcast %cst_121 : f32 to vector<8x128xf32>
    %205 = arith.cmpf oge, %189, %204 : vector<8x128xf32>
    %206 = arith.extui %205 : vector<8x128xi1> to vector<8x128xi32>
    %207 = arith.sitofp %206 : vector<8x128xi32> to vector<8x128xf32>
    %cst_122 = arith.constant 1.000000e-03 : f32
    %208 = vector.broadcast %cst_122 : f32 to vector<8x128xf32>
    %209 = arith.cmpf oge, %191, %208 : vector<8x128xf32>
    %210 = arith.extui %209 : vector<8x128xi1> to vector<8x128xi32>
    %211 = arith.sitofp %210 : vector<8x128xi32> to vector<8x128xf32>
    %cst_123 = arith.constant 1.000000e-03 : f32
    %212 = vector.broadcast %cst_123 : f32 to vector<8x128xf32>
    %213 = arith.cmpf oge, %193, %212 : vector<8x128xf32>
    %214 = arith.extui %213 : vector<8x128xi1> to vector<8x128xi32>
    %215 = arith.sitofp %214 : vector<8x128xi32> to vector<8x128xf32>
    %cst_124 = arith.constant 1.000000e-03 : f32
    %216 = vector.broadcast %cst_124 : f32 to vector<8x128xf32>
    %217 = arith.cmpf oge, %195, %216 : vector<8x128xf32>
    %218 = arith.extui %217 : vector<8x128xi1> to vector<8x128xi32>
    %219 = arith.sitofp %218 : vector<8x128xi32> to vector<8x128xf32>
    %cst_125 = arith.constant 1.000000e-03 : f32
    %220 = vector.broadcast %cst_125 : f32 to vector<8x128xf32>
    %221 = arith.cmpf oge, %197, %220 : vector<8x128xf32>
    %222 = arith.extui %221 : vector<8x128xi1> to vector<8x128xi32>
    %223 = arith.sitofp %222 : vector<8x128xi32> to vector<8x128xf32>
    %cst_126 = arith.constant 1.000000e-03 : f32
    %224 = vector.broadcast %cst_126 : f32 to vector<8x128xf32>
    %225 = arith.cmpf oge, %199, %224 : vector<8x128xf32>
    %226 = arith.extui %225 : vector<8x128xi1> to vector<8x128xi32>
    %227 = arith.sitofp %226 : vector<8x128xi32> to vector<8x128xf32>
    %cst_127 = arith.constant 1.000000e-03 : f32
    %228 = vector.broadcast %cst_127 : f32 to vector<8x128xf32>
    %229 = arith.cmpf oge, %201, %228 : vector<8x128xf32>
    %230 = arith.extui %229 : vector<8x128xi1> to vector<8x128xi32>
    %231 = arith.sitofp %230 : vector<8x128xi32> to vector<8x128xf32>
    %cst_128 = arith.constant 1.000000e-03 : f32
    %232 = vector.broadcast %cst_128 : f32 to vector<8x128xf32>
    %233 = arith.cmpf oge, %203, %232 : vector<8x128xf32>
    %234 = arith.extui %233 : vector<8x128xi1> to vector<8x128xi32>
    %235 = arith.sitofp %234 : vector<8x128xi32> to vector<8x128xf32>
    %cst_129 = arith.constant 1.000000e-03 : f32
    %236 = vector.broadcast %cst_129 : f32 to vector<8x128xf32>
    %237 = arith.cmpf oge, %189, %236 : vector<8x128xf32>
    %cst_130 = arith.constant -1.000000e+09 : f32
    %238 = vector.broadcast %cst_130 : f32 to vector<8x128xf32>
    %239 = arith.select %237, %189, %238 : vector<8x128xi1>, vector<8x128xf32>
    %cst_131 = arith.constant 1.000000e-03 : f32
    %240 = vector.broadcast %cst_131 : f32 to vector<8x128xf32>
    %241 = arith.cmpf oge, %191, %240 : vector<8x128xf32>
    %cst_132 = arith.constant -1.000000e+09 : f32
    %242 = vector.broadcast %cst_132 : f32 to vector<8x128xf32>
    %243 = arith.select %241, %191, %242 : vector<8x128xi1>, vector<8x128xf32>
    %cst_133 = arith.constant 1.000000e-03 : f32
    %244 = vector.broadcast %cst_133 : f32 to vector<8x128xf32>
    %245 = arith.cmpf oge, %193, %244 : vector<8x128xf32>
    %cst_134 = arith.constant -1.000000e+09 : f32
    %246 = vector.broadcast %cst_134 : f32 to vector<8x128xf32>
    %247 = arith.select %245, %193, %246 : vector<8x128xi1>, vector<8x128xf32>
    %cst_135 = arith.constant 1.000000e-03 : f32
    %248 = vector.broadcast %cst_135 : f32 to vector<8x128xf32>
    %249 = arith.cmpf oge, %195, %248 : vector<8x128xf32>
    %cst_136 = arith.constant -1.000000e+09 : f32
    %250 = vector.broadcast %cst_136 : f32 to vector<8x128xf32>
    %251 = arith.select %249, %195, %250 : vector<8x128xi1>, vector<8x128xf32>
    %cst_137 = arith.constant 1.000000e-03 : f32
    %252 = vector.broadcast %cst_137 : f32 to vector<8x128xf32>
    %253 = arith.cmpf oge, %197, %252 : vector<8x128xf32>
    %cst_138 = arith.constant -1.000000e+09 : f32
    %254 = vector.broadcast %cst_138 : f32 to vector<8x128xf32>
    %255 = arith.select %253, %197, %254 : vector<8x128xi1>, vector<8x128xf32>
    %cst_139 = arith.constant 1.000000e-03 : f32
    %256 = vector.broadcast %cst_139 : f32 to vector<8x128xf32>
    %257 = arith.cmpf oge, %199, %256 : vector<8x128xf32>
    %cst_140 = arith.constant -1.000000e+09 : f32
    %258 = vector.broadcast %cst_140 : f32 to vector<8x128xf32>
    %259 = arith.select %257, %199, %258 : vector<8x128xi1>, vector<8x128xf32>
    %cst_141 = arith.constant 1.000000e-03 : f32
    %260 = vector.broadcast %cst_141 : f32 to vector<8x128xf32>
    %261 = arith.cmpf oge, %201, %260 : vector<8x128xf32>
    %cst_142 = arith.constant -1.000000e+09 : f32
    %262 = vector.broadcast %cst_142 : f32 to vector<8x128xf32>
    %263 = arith.select %261, %201, %262 : vector<8x128xi1>, vector<8x128xf32>
    %cst_143 = arith.constant 1.000000e-03 : f32
    %264 = vector.broadcast %cst_143 : f32 to vector<8x128xf32>
    %265 = arith.cmpf oge, %203, %264 : vector<8x128xf32>
    %cst_144 = arith.constant -1.000000e+09 : f32
    %266 = vector.broadcast %cst_144 : f32 to vector<8x128xf32>
    %267 = arith.select %265, %203, %266 : vector<8x128xi1>, vector<8x128xf32>
    %cst_145 = arith.constant 1.000000e+30 : f32
    %268 = vector.broadcast %cst_145 : f32 to vector<8x128xf32>
    %cst_146 = arith.constant 1.000000e+30 : f32
    %269 = vector.broadcast %cst_146 : f32 to vector<8x128xf32>
    %cst_147 = arith.constant 1.000000e+30 : f32
    %270 = vector.broadcast %cst_147 : f32 to vector<8x128xf32>
    %cst_148 = arith.constant 1.000000e+30 : f32
    %271 = vector.broadcast %cst_148 : f32 to vector<8x128xf32>
    %cst_149 = arith.constant 1.000000e+30 : f32
    %272 = vector.broadcast %cst_149 : f32 to vector<8x128xf32>
    %cst_150 = arith.constant 1.000000e+30 : f32
    %273 = vector.broadcast %cst_150 : f32 to vector<8x128xf32>
    %cst_151 = arith.constant 1.000000e+30 : f32
    %274 = vector.broadcast %cst_151 : f32 to vector<8x128xf32>
    %cst_152 = arith.constant 1.000000e+30 : f32
    %275 = vector.broadcast %cst_152 : f32 to vector<8x128xf32>
    %c0_i32_153 = arith.constant 0 : i32
    %c128_i32 = arith.constant 128 : i32
    %276 = arith.addi %c0_i32_153, %c128_i32 : i32
    %c1_i32 = arith.constant 1 : i32
    %277:8 = scf.for %arg9 = %c0_i32_153 to %276 step %c1_i32 iter_args(%arg10 = %268, %arg11 = %269, %arg12 = %270, %arg13 = %271, %arg14 = %272, %arg15 = %273, %arg16 = %274, %arg17 = %275) -> (vector<8x128xf32>, vector<8x128xf32>, vector<8x128xf32>, vector<8x128xf32>, vector<8x128xf32>, vector<8x128xf32>, vector<8x128xf32>, vector<8x128xf32>)  : i32 {
      %452 = arith.index_cast %arg0 : i32 to index
      %453 = arith.index_cast %arg9 : i32 to index
      %454 = memref.load %arg3[%452, %453] : memref<2x128xf32, #tpu.memory_space<smem>>
      %455 = vector.broadcast %454 : f32 to vector<8x128xf32>
      %456 = arith.subf %455, %239 : vector<8x128xf32>
      %457 = arith.mulf %456, %456 : vector<8x128xf32>
      %458 = arith.minimumf %arg10, %457 : vector<8x128xf32>
      %459 = vector.broadcast %454 : f32 to vector<8x128xf32>
      %460 = arith.subf %459, %243 : vector<8x128xf32>
      %461 = arith.mulf %460, %460 : vector<8x128xf32>
      %462 = arith.minimumf %457, %461 : vector<8x128xf32>
      %463 = arith.minimumf %arg11, %461 : vector<8x128xf32>
      %464 = vector.broadcast %454 : f32 to vector<8x128xf32>
      %465 = arith.subf %464, %247 : vector<8x128xf32>
      %466 = arith.mulf %465, %465 : vector<8x128xf32>
      %467 = arith.minimumf %462, %466 : vector<8x128xf32>
      %468 = arith.minimumf %arg12, %466 : vector<8x128xf32>
      %469 = vector.broadcast %454 : f32 to vector<8x128xf32>
      %470 = arith.subf %469, %251 : vector<8x128xf32>
      %471 = arith.mulf %470, %470 : vector<8x128xf32>
      %472 = arith.minimumf %467, %471 : vector<8x128xf32>
      %473 = arith.minimumf %arg13, %471 : vector<8x128xf32>
      %474 = vector.broadcast %454 : f32 to vector<8x128xf32>
      %475 = arith.subf %474, %255 : vector<8x128xf32>
      %476 = arith.mulf %475, %475 : vector<8x128xf32>
      %477 = arith.minimumf %472, %476 : vector<8x128xf32>
      %478 = arith.minimumf %arg14, %476 : vector<8x128xf32>
      %479 = vector.broadcast %454 : f32 to vector<8x128xf32>
      %480 = arith.subf %479, %259 : vector<8x128xf32>
      %481 = arith.mulf %480, %480 : vector<8x128xf32>
      %482 = arith.minimumf %477, %481 : vector<8x128xf32>
      %483 = arith.minimumf %arg15, %481 : vector<8x128xf32>
      %484 = vector.broadcast %454 : f32 to vector<8x128xf32>
      %485 = arith.subf %484, %263 : vector<8x128xf32>
      %486 = arith.mulf %485, %485 : vector<8x128xf32>
      %487 = arith.minimumf %482, %486 : vector<8x128xf32>
      %488 = arith.minimumf %arg16, %486 : vector<8x128xf32>
      %489 = vector.broadcast %454 : f32 to vector<8x128xf32>
      %490 = arith.subf %489, %267 : vector<8x128xf32>
      %491 = arith.mulf %490, %490 : vector<8x128xf32>
      %492 = arith.minimumf %487, %491 : vector<8x128xf32>
      %493 = arith.minimumf %arg17, %491 : vector<8x128xf32>
      %c0_i32_283 = arith.constant 0 : i32
      %494 = arith.addi %c0_i32_283, %arg9 : i32
      %c0_284 = arith.constant 0 : index
      %c0_285 = arith.constant 0 : index
      %495 = arith.index_cast %494 : i32 to index
      %c0_286 = arith.constant 0 : index
      %c0_287 = arith.constant 0 : index
      %496 = vector.load %arg8[%c0_284, %c0_285, %495, %c0_286, %c0_287] : memref<1x1x256x8x128xf32, #tpu.memory_space<vmem>>, vector<1x1x1x8x128xf32>
      %497 = vector.shape_cast %496 : vector<1x1x1x8x128xf32> to vector<8x128xf32>
      %498 = arith.minimumf %497, %492 : vector<8x128xf32>
      %c0_i32_288 = arith.constant 0 : i32
      %499 = arith.addi %c0_i32_288, %arg9 : i32
      %c0_289 = arith.constant 0 : index
      %c0_290 = arith.constant 0 : index
      %500 = arith.index_cast %499 : i32 to index
      %c0_291 = arith.constant 0 : index
      %c0_292 = arith.constant 0 : index
      %501 = vector.load %arg8[%c0_289, %c0_290, %500, %c0_291, %c0_292] : memref<1x1x256x8x128xf32, #tpu.memory_space<vmem>>, vector<1x1x1x8x128xf32>
      %502 = vector.shape_cast %501 : vector<1x1x1x8x128xf32> to vector<8x128xf32>
      %503 = vector.shape_cast %498 : vector<8x128xf32> to vector<1x1x1x8x128xf32>
      tpu.vector_store %arg8[%c0_289, %c0_290, %500, %c0_291, %c0_292], %503 {strides = array<i32>} : memref<1x1x256x8x128xf32, #tpu.memory_space<vmem>>, vector<1x1x1x8x128xf32>,
      scf.yield %458, %463, %468, %473, %478, %483, %488, %493 : vector<8x128xf32>, vector<8x128xf32>, vector<8x128xf32>, vector<8x128xf32>, vector<8x128xf32>, vector<8x128xf32>, vector<8x128xf32>, vector<8x128xf32>
    }
    %c128_i32_154 = arith.constant 128 : i32
    %278 = arith.mulf %277#0, %207 : vector<8x128xf32>
    %279 = arith.addf %3, %278 : vector<8x128xf32>
    %280 = arith.addf %3, %207 : vector<8x128xf32>
    %281 = arith.mulf %277#1, %211 : vector<8x128xf32>
    %282 = arith.addf %279, %281 : vector<8x128xf32>
    %283 = arith.addf %280, %211 : vector<8x128xf32>
    %284 = arith.mulf %277#2, %215 : vector<8x128xf32>
    %285 = arith.addf %282, %284 : vector<8x128xf32>
    %286 = arith.addf %283, %215 : vector<8x128xf32>
    %287 = arith.mulf %277#3, %219 : vector<8x128xf32>
    %288 = arith.addf %285, %287 : vector<8x128xf32>
    %289 = arith.addf %286, %219 : vector<8x128xf32>
    %290 = arith.mulf %277#4, %223 : vector<8x128xf32>
    %291 = arith.addf %288, %290 : vector<8x128xf32>
    %292 = arith.addf %289, %223 : vector<8x128xf32>
    %293 = arith.mulf %277#5, %227 : vector<8x128xf32>
    %294 = arith.addf %291, %293 : vector<8x128xf32>
    %295 = arith.addf %292, %227 : vector<8x128xf32>
    %296 = arith.mulf %277#6, %231 : vector<8x128xf32>
    %297 = arith.addf %294, %296 : vector<8x128xf32>
    %298 = arith.addf %295, %231 : vector<8x128xf32>
    %299 = arith.mulf %277#7, %235 : vector<8x128xf32>
    %300 = arith.addf %297, %299 : vector<8x128xf32>
    %301 = arith.addf %298, %235 : vector<8x128xf32>
    %c0_155 = arith.constant 0 : index
    %c0_156 = arith.constant 0 : index
    %c0_157 = arith.constant 0 : index
    %c0_158 = arith.constant 0 : index
    %302 = vector.load %arg6[%c0_155, %c0_156, %c0_157, %c0_158] : memref<1x8x8x128xf32, #tpu.memory_space<vmem>>, vector<1x1x8x128xf32>
    %303 = vector.shape_cast %302 : vector<1x1x8x128xf32> to vector<8x128xf32>
    %c0_159 = arith.constant 0 : index
    %c1_160 = arith.constant 1 : index
    %c0_161 = arith.constant 0 : index
    %c0_162 = arith.constant 0 : index
    %304 = vector.load %arg6[%c0_159, %c1_160, %c0_161, %c0_162] : memref<1x8x8x128xf32, #tpu.memory_space<vmem>>, vector<1x1x8x128xf32>
    %305 = vector.shape_cast %304 : vector<1x1x8x128xf32> to vector<8x128xf32>
    %c0_163 = arith.constant 0 : index
    %c2_164 = arith.constant 2 : index
    %c0_165 = arith.constant 0 : index
    %c0_166 = arith.constant 0 : index
    %306 = vector.load %arg6[%c0_163, %c2_164, %c0_165, %c0_166] : memref<1x8x8x128xf32, #tpu.memory_space<vmem>>, vector<1x1x8x128xf32>
    %307 = vector.shape_cast %306 : vector<1x1x8x128xf32> to vector<8x128xf32>
    %c0_167 = arith.constant 0 : index
    %c3_168 = arith.constant 3 : index
    %c0_169 = arith.constant 0 : index
    %c0_170 = arith.constant 0 : index
    %308 = vector.load %arg6[%c0_167, %c3_168, %c0_169, %c0_170] : memref<1x8x8x128xf32, #tpu.memory_space<vmem>>, vector<1x1x8x128xf32>
    %309 = vector.shape_cast %308 : vector<1x1x8x128xf32> to vector<8x128xf32>
    %c0_171 = arith.constant 0 : index
    %c4_172 = arith.constant 4 : index
    %c0_173 = arith.constant 0 : index
    %c0_174 = arith.constant 0 : index
    %310 = vector.load %arg6[%c0_171, %c4_172, %c0_173, %c0_174] : memref<1x8x8x128xf32, #tpu.memory_space<vmem>>, vector<1x1x8x128xf32>
    %311 = vector.shape_cast %310 : vector<1x1x8x128xf32> to vector<8x128xf32>
    %c0_175 = arith.constant 0 : index
    %c5_176 = arith.constant 5 : index
    %c0_177 = arith.constant 0 : index
    %c0_178 = arith.constant 0 : index
    %312 = vector.load %arg6[%c0_175, %c5_176, %c0_177, %c0_178] : memref<1x8x8x128xf32, #tpu.memory_space<vmem>>, vector<1x1x8x128xf32>
    %313 = vector.shape_cast %312 : vector<1x1x8x128xf32> to vector<8x128xf32>
    %c0_179 = arith.constant 0 : index
    %c6_180 = arith.constant 6 : index
    %c0_181 = arith.constant 0 : index
    %c0_182 = arith.constant 0 : index
    %314 = vector.load %arg6[%c0_179, %c6_180, %c0_181, %c0_182] : memref<1x8x8x128xf32, #tpu.memory_space<vmem>>, vector<1x1x8x128xf32>
    %315 = vector.shape_cast %314 : vector<1x1x8x128xf32> to vector<8x128xf32>
    %c0_183 = arith.constant 0 : index
    %c7_184 = arith.constant 7 : index
    %c0_185 = arith.constant 0 : index
    %c0_186 = arith.constant 0 : index
    %316 = vector.load %arg6[%c0_183, %c7_184, %c0_185, %c0_186] : memref<1x8x8x128xf32, #tpu.memory_space<vmem>>, vector<1x1x8x128xf32>
    %317 = vector.shape_cast %316 : vector<1x1x8x128xf32> to vector<8x128xf32>
    %cst_187 = arith.constant 1.000000e-03 : f32
    %318 = vector.broadcast %cst_187 : f32 to vector<8x128xf32>
    %319 = arith.cmpf oge, %303, %318 : vector<8x128xf32>
    %320 = arith.extui %319 : vector<8x128xi1> to vector<8x128xi32>
    %321 = arith.sitofp %320 : vector<8x128xi32> to vector<8x128xf32>
    %cst_188 = arith.constant 1.000000e-03 : f32
    %322 = vector.broadcast %cst_188 : f32 to vector<8x128xf32>
    %323 = arith.cmpf oge, %305, %322 : vector<8x128xf32>
    %324 = arith.extui %323 : vector<8x128xi1> to vector<8x128xi32>
    %325 = arith.sitofp %324 : vector<8x128xi32> to vector<8x128xf32>
    %cst_189 = arith.constant 1.000000e-03 : f32
    %326 = vector.broadcast %cst_189 : f32 to vector<8x128xf32>
    %327 = arith.cmpf oge, %307, %326 : vector<8x128xf32>
    %328 = arith.extui %327 : vector<8x128xi1> to vector<8x128xi32>
    %329 = arith.sitofp %328 : vector<8x128xi32> to vector<8x128xf32>
    %cst_190 = arith.constant 1.000000e-03 : f32
    %330 = vector.broadcast %cst_190 : f32 to vector<8x128xf32>
    %331 = arith.cmpf oge, %309, %330 : vector<8x128xf32>
    %332 = arith.extui %331 : vector<8x128xi1> to vector<8x128xi32>
    %333 = arith.sitofp %332 : vector<8x128xi32> to vector<8x128xf32>
    %cst_191 = arith.constant 1.000000e-03 : f32
    %334 = vector.broadcast %cst_191 : f32 to vector<8x128xf32>
    %335 = arith.cmpf oge, %311, %334 : vector<8x128xf32>
    %336 = arith.extui %335 : vector<8x128xi1> to vector<8x128xi32>
    %337 = arith.sitofp %336 : vector<8x128xi32> to vector<8x128xf32>
    %cst_192 = arith.constant 1.000000e-03 : f32
    %338 = vector.broadcast %cst_192 : f32 to vector<8x128xf32>
    %339 = arith.cmpf oge, %313, %338 : vector<8x128xf32>
    %340 = arith.extui %339 : vector<8x128xi1> to vector<8x128xi32>
    %341 = arith.sitofp %340 : vector<8x128xi32> to vector<8x128xf32>
    %cst_193 = arith.constant 1.000000e-03 : f32
    %342 = vector.broadcast %cst_193 : f32 to vector<8x128xf32>
    %343 = arith.cmpf oge, %315, %342 : vector<8x128xf32>
    %344 = arith.extui %343 : vector<8x128xi1> to vector<8x128xi32>
    %345 = arith.sitofp %344 : vector<8x128xi32> to vector<8x128xf32>
    %cst_194 = arith.constant 1.000000e-03 : f32
    %346 = vector.broadcast %cst_194 : f32 to vector<8x128xf32>
    %347 = arith.cmpf oge, %317, %346 : vector<8x128xf32>
    %348 = arith.extui %347 : vector<8x128xi1> to vector<8x128xi32>
    %349 = arith.sitofp %348 : vector<8x128xi32> to vector<8x128xf32>
    %cst_195 = arith.constant 1.000000e-03 : f32
    %350 = vector.broadcast %cst_195 : f32 to vector<8x128xf32>
    %351 = arith.cmpf oge, %303, %350 : vector<8x128xf32>
    %cst_196 = arith.constant -1.000000e+09 : f32
    %352 = vector.broadcast %cst_196 : f32 to vector<8x128xf32>
    %353 = arith.select %351, %303, %352 : vector<8x128xi1>, vector<8x128xf32>
    %cst_197 = arith.constant 1.000000e-03 : f32
    %354 = vector.broadcast %cst_197 : f32 to vector<8x128xf32>
    %355 = arith.cmpf oge, %305, %354 : vector<8x128xf32>
    %cst_198 = arith.constant -1.000000e+09 : f32
    %356 = vector.broadcast %cst_198 : f32 to vector<8x128xf32>
    %357 = arith.select %355, %305, %356 : vector<8x128xi1>, vector<8x128xf32>
    %cst_199 = arith.constant 1.000000e-03 : f32
    %358 = vector.broadcast %cst_199 : f32 to vector<8x128xf32>
    %359 = arith.cmpf oge, %307, %358 : vector<8x128xf32>
    %cst_200 = arith.constant -1.000000e+09 : f32
    %360 = vector.broadcast %cst_200 : f32 to vector<8x128xf32>
    %361 = arith.select %359, %307, %360 : vector<8x128xi1>, vector<8x128xf32>
    %cst_201 = arith.constant 1.000000e-03 : f32
    %362 = vector.broadcast %cst_201 : f32 to vector<8x128xf32>
    %363 = arith.cmpf oge, %309, %362 : vector<8x128xf32>
    %cst_202 = arith.constant -1.000000e+09 : f32
    %364 = vector.broadcast %cst_202 : f32 to vector<8x128xf32>
    %365 = arith.select %363, %309, %364 : vector<8x128xi1>, vector<8x128xf32>
    %cst_203 = arith.constant 1.000000e-03 : f32
    %366 = vector.broadcast %cst_203 : f32 to vector<8x128xf32>
    %367 = arith.cmpf oge, %311, %366 : vector<8x128xf32>
    %cst_204 = arith.constant -1.000000e+09 : f32
    %368 = vector.broadcast %cst_204 : f32 to vector<8x128xf32>
    %369 = arith.select %367, %311, %368 : vector<8x128xi1>, vector<8x128xf32>
    %cst_205 = arith.constant 1.000000e-03 : f32
    %370 = vector.broadcast %cst_205 : f32 to vector<8x128xf32>
    %371 = arith.cmpf oge, %313, %370 : vector<8x128xf32>
    %cst_206 = arith.constant -1.000000e+09 : f32
    %372 = vector.broadcast %cst_206 : f32 to vector<8x128xf32>
    %373 = arith.select %371, %313, %372 : vector<8x128xi1>, vector<8x128xf32>
    %cst_207 = arith.constant 1.000000e-03 : f32
    %374 = vector.broadcast %cst_207 : f32 to vector<8x128xf32>
    %375 = arith.cmpf oge, %315, %374 : vector<8x128xf32>
    %cst_208 = arith.constant -1.000000e+09 : f32
    %376 = vector.broadcast %cst_208 : f32 to vector<8x128xf32>
    %377 = arith.select %375, %315, %376 : vector<8x128xi1>, vector<8x128xf32>
    %cst_209 = arith.constant 1.000000e-03 : f32
    %378 = vector.broadcast %cst_209 : f32 to vector<8x128xf32>
    %379 = arith.cmpf oge, %317, %378 : vector<8x128xf32>
    %cst_210 = arith.constant -1.000000e+09 : f32
    %380 = vector.broadcast %cst_210 : f32 to vector<8x128xf32>
    %381 = arith.select %379, %317, %380 : vector<8x128xi1>, vector<8x128xf32>
    %cst_211 = arith.constant 1.000000e+30 : f32
    %382 = vector.broadcast %cst_211 : f32 to vector<8x128xf32>
    %cst_212 = arith.constant 1.000000e+30 : f32
    %383 = vector.broadcast %cst_212 : f32 to vector<8x128xf32>
    %cst_213 = arith.constant 1.000000e+30 : f32
    %384 = vector.broadcast %cst_213 : f32 to vector<8x128xf32>
    %cst_214 = arith.constant 1.000000e+30 : f32
    %385 = vector.broadcast %cst_214 : f32 to vector<8x128xf32>
    %cst_215 = arith.constant 1.000000e+30 : f32
    %386 = vector.broadcast %cst_215 : f32 to vector<8x128xf32>
    %cst_216 = arith.constant 1.000000e+30 : f32
    %387 = vector.broadcast %cst_216 : f32 to vector<8x128xf32>
    %cst_217 = arith.constant 1.000000e+30 : f32
    %388 = vector.broadcast %cst_217 : f32 to vector<8x128xf32>
    %cst_218 = arith.constant 1.000000e+30 : f32
    %389 = vector.broadcast %cst_218 : f32 to vector<8x128xf32>
    %c0_i32_219 = arith.constant 0 : i32
    %c128_i32_220 = arith.constant 128 : i32
    %390 = arith.addi %c0_i32_219, %c128_i32_220 : i32
    %c1_i32_221 = arith.constant 1 : i32
    %391:8 = scf.for %arg9 = %c0_i32_219 to %390 step %c1_i32_221 iter_args(%arg10 = %382, %arg11 = %383, %arg12 = %384, %arg13 = %385, %arg14 = %386, %arg15 = %387, %arg16 = %388, %arg17 = %389) -> (vector<8x128xf32>, vector<8x128xf32>, vector<8x128xf32>, vector<8x128xf32>, vector<8x128xf32>, vector<8x128xf32>, vector<8x128xf32>, vector<8x128xf32>)  : i32 {
      %452 = arith.index_cast %arg0 : i32 to index
      %453 = arith.index_cast %arg9 : i32 to index
      %454 = memref.load %arg3[%452, %453] : memref<2x128xf32, #tpu.memory_space<smem>>
      %455 = vector.broadcast %454 : f32 to vector<8x128xf32>
      %456 = arith.subf %455, %353 : vector<8x128xf32>
      %457 = arith.mulf %456, %456 : vector<8x128xf32>
      %458 = arith.minimumf %arg10, %457 : vector<8x128xf32>
      %459 = vector.broadcast %454 : f32 to vector<8x128xf32>
      %460 = arith.subf %459, %357 : vector<8x128xf32>
      %461 = arith.mulf %460, %460 : vector<8x128xf32>
      %462 = arith.minimumf %457, %461 : vector<8x128xf32>
      %463 = arith.minimumf %arg11, %461 : vector<8x128xf32>
      %464 = vector.broadcast %454 : f32 to vector<8x128xf32>
      %465 = arith.subf %464, %361 : vector<8x128xf32>
      %466 = arith.mulf %465, %465 : vector<8x128xf32>
      %467 = arith.minimumf %462, %466 : vector<8x128xf32>
      %468 = arith.minimumf %arg12, %466 : vector<8x128xf32>
      %469 = vector.broadcast %454 : f32 to vector<8x128xf32>
      %470 = arith.subf %469, %365 : vector<8x128xf32>
      %471 = arith.mulf %470, %470 : vector<8x128xf32>
      %472 = arith.minimumf %467, %471 : vector<8x128xf32>
      %473 = arith.minimumf %arg13, %471 : vector<8x128xf32>
      %474 = vector.broadcast %454 : f32 to vector<8x128xf32>
      %475 = arith.subf %474, %369 : vector<8x128xf32>
      %476 = arith.mulf %475, %475 : vector<8x128xf32>
      %477 = arith.minimumf %472, %476 : vector<8x128xf32>
      %478 = arith.minimumf %arg14, %476 : vector<8x128xf32>
      %479 = vector.broadcast %454 : f32 to vector<8x128xf32>
      %480 = arith.subf %479, %373 : vector<8x128xf32>
      %481 = arith.mulf %480, %480 : vector<8x128xf32>
      %482 = arith.minimumf %477, %481 : vector<8x128xf32>
      %483 = arith.minimumf %arg15, %481 : vector<8x128xf32>
      %484 = vector.broadcast %454 : f32 to vector<8x128xf32>
      %485 = arith.subf %484, %377 : vector<8x128xf32>
      %486 = arith.mulf %485, %485 : vector<8x128xf32>
      %487 = arith.minimumf %482, %486 : vector<8x128xf32>
      %488 = arith.minimumf %arg16, %486 : vector<8x128xf32>
      %489 = vector.broadcast %454 : f32 to vector<8x128xf32>
      %490 = arith.subf %489, %381 : vector<8x128xf32>
      %491 = arith.mulf %490, %490 : vector<8x128xf32>
      %492 = arith.minimumf %487, %491 : vector<8x128xf32>
      %493 = arith.minimumf %arg17, %491 : vector<8x128xf32>
      %c128_i32_283 = arith.constant 128 : i32
      %494 = arith.addi %c128_i32_283, %arg9 : i32
      %c0_284 = arith.constant 0 : index
      %c0_285 = arith.constant 0 : index
      %495 = arith.index_cast %494 : i32 to index
      %c0_286 = arith.constant 0 : index
      %c0_287 = arith.constant 0 : index
      %496 = vector.load %arg8[%c0_284, %c0_285, %495, %c0_286, %c0_287] : memref<1x1x256x8x128xf32, #tpu.memory_space<vmem>>, vector<1x1x1x8x128xf32>
      %497 = vector.shape_cast %496 : vector<1x1x1x8x128xf32> to vector<8x128xf32>
      %498 = arith.minimumf %497, %492 : vector<8x128xf32>
      %c128_i32_288 = arith.constant 128 : i32
      %499 = arith.addi %c128_i32_288, %arg9 : i32
      %c0_289 = arith.constant 0 : index
      %c0_290 = arith.constant 0 : index
      %500 = arith.index_cast %499 : i32 to index
      %c0_291 = arith.constant 0 : index
      %c0_292 = arith.constant 0 : index
      %501 = vector.load %arg8[%c0_289, %c0_290, %500, %c0_291, %c0_292] : memref<1x1x256x8x128xf32, #tpu.memory_space<vmem>>, vector<1x1x1x8x128xf32>
      %502 = vector.shape_cast %501 : vector<1x1x1x8x128xf32> to vector<8x128xf32>
      %503 = vector.shape_cast %498 : vector<8x128xf32> to vector<1x1x1x8x128xf32>
      tpu.vector_store %arg8[%c0_289, %c0_290, %500, %c0_291, %c0_292], %503 {strides = array<i32>} : memref<1x1x256x8x128xf32, #tpu.memory_space<vmem>>, vector<1x1x1x8x128xf32>,
      scf.yield %458, %463, %468, %473, %478, %483, %488, %493 : vector<8x128xf32>, vector<8x128xf32>, vector<8x128xf32>, vector<8x128xf32>, vector<8x128xf32>, vector<8x128xf32>, vector<8x128xf32>, vector<8x128xf32>
    }
    %c128_i32_222 = arith.constant 128 : i32
    %392 = arith.mulf %391#0, %321 : vector<8x128xf32>
    %393 = arith.addf %3, %392 : vector<8x128xf32>
    %394 = arith.addf %3, %321 : vector<8x128xf32>
    %395 = arith.mulf %391#1, %325 : vector<8x128xf32>
    %396 = arith.addf %393, %395 : vector<8x128xf32>
    %397 = arith.addf %394, %325 : vector<8x128xf32>
    %398 = arith.mulf %391#2, %329 : vector<8x128xf32>
    %399 = arith.addf %396, %398 : vector<8x128xf32>
    %400 = arith.addf %397, %329 : vector<8x128xf32>
    %401 = arith.mulf %391#3, %333 : vector<8x128xf32>
    %402 = arith.addf %399, %401 : vector<8x128xf32>
    %403 = arith.addf %400, %333 : vector<8x128xf32>
    %404 = arith.mulf %391#4, %337 : vector<8x128xf32>
    %405 = arith.addf %402, %404 : vector<8x128xf32>
    %406 = arith.addf %403, %337 : vector<8x128xf32>
    %407 = arith.mulf %391#5, %341 : vector<8x128xf32>
    %408 = arith.addf %405, %407 : vector<8x128xf32>
    %409 = arith.addf %406, %341 : vector<8x128xf32>
    %410 = arith.mulf %391#6, %345 : vector<8x128xf32>
    %411 = arith.addf %408, %410 : vector<8x128xf32>
    %412 = arith.addf %409, %345 : vector<8x128xf32>
    %413 = arith.mulf %391#7, %349 : vector<8x128xf32>
    %414 = arith.addf %411, %413 : vector<8x128xf32>
    %415 = arith.addf %412, %349 : vector<8x128xf32>
    %c0_223 = arith.constant 0 : index
    %c0_224 = arith.constant 0 : index
    %c0_225 = arith.constant 0 : index
    %c0_226 = arith.constant 0 : index
    %c0_227 = arith.constant 0 : index
    %416 = vector.load %arg7[%c0_223, %c0_224, %c0_225, %c0_226, %c0_227] : memref<1x1x6x8x128xf32, #tpu.memory_space<vmem>>, vector<1x1x1x8x128xf32>
    %417 = vector.shape_cast %416 : vector<1x1x1x8x128xf32> to vector<8x128xf32>
    %418 = arith.addf %417, %185 : vector<8x128xf32>
    %c0_228 = arith.constant 0 : index
    %c0_229 = arith.constant 0 : index
    %c0_230 = arith.constant 0 : index
    %c0_231 = arith.constant 0 : index
    %c0_232 = arith.constant 0 : index
    %419 = vector.load %arg7[%c0_228, %c0_229, %c0_230, %c0_231, %c0_232] : memref<1x1x6x8x128xf32, #tpu.memory_space<vmem>>, vector<1x1x1x8x128xf32>
    %420 = vector.shape_cast %419 : vector<1x1x1x8x128xf32> to vector<8x128xf32>
    %421 = vector.shape_cast %418 : vector<8x128xf32> to vector<1x1x1x8x128xf32>
    tpu.vector_store %arg7[%c0_228, %c0_229, %c0_230, %c0_231, %c0_232], %421 {strides = array<i32>} : memref<1x1x6x8x128xf32, #tpu.memory_space<vmem>>, vector<1x1x1x8x128xf32>,
    %c0_233 = arith.constant 0 : index
    %c0_234 = arith.constant 0 : index
    %c1_235 = arith.constant 1 : index
    %c0_236 = arith.constant 0 : index
    %c0_237 = arith.constant 0 : index
    %422 = vector.load %arg7[%c0_233, %c0_234, %c1_235, %c0_236, %c0_237] : memref<1x1x6x8x128xf32, #tpu.memory_space<vmem>>, vector<1x1x1x8x128xf32>
    %423 = vector.shape_cast %422 : vector<1x1x1x8x128xf32> to vector<8x128xf32>
    %424 = arith.addf %423, %187 : vector<8x128xf32>
    %c0_238 = arith.constant 0 : index
    %c0_239 = arith.constant 0 : index
    %c1_240 = arith.constant 1 : index
    %c0_241 = arith.constant 0 : index
    %c0_242 = arith.constant 0 : index
    %425 = vector.load %arg7[%c0_238, %c0_239, %c1_240, %c0_241, %c0_242] : memref<1x1x6x8x128xf32, #tpu.memory_space<vmem>>, vector<1x1x1x8x128xf32>
    %426 = vector.shape_cast %425 : vector<1x1x1x8x128xf32> to vector<8x128xf32>
    %427 = vector.shape_cast %424 : vector<8x128xf32> to vector<1x1x1x8x128xf32>
    tpu.vector_store %arg7[%c0_238, %c0_239, %c1_240, %c0_241, %c0_242], %427 {strides = array<i32>} : memref<1x1x6x8x128xf32, #tpu.memory_space<vmem>>, vector<1x1x1x8x128xf32>,
    %c0_243 = arith.constant 0 : index
    %c0_244 = arith.constant 0 : index
    %c2_245 = arith.constant 2 : index
    %c0_246 = arith.constant 0 : index
    %c0_247 = arith.constant 0 : index
    %428 = vector.load %arg7[%c0_243, %c0_244, %c2_245, %c0_246, %c0_247] : memref<1x1x6x8x128xf32, #tpu.memory_space<vmem>>, vector<1x1x1x8x128xf32>
    %429 = vector.shape_cast %428 : vector<1x1x1x8x128xf32> to vector<8x128xf32>
    %430 = arith.addf %429, %300 : vector<8x128xf32>
    %c0_248 = arith.constant 0 : index
    %c0_249 = arith.constant 0 : index
    %c2_250 = arith.constant 2 : index
    %c0_251 = arith.constant 0 : index
    %c0_252 = arith.constant 0 : index
    %431 = vector.load %arg7[%c0_248, %c0_249, %c2_250, %c0_251, %c0_252] : memref<1x1x6x8x128xf32, #tpu.memory_space<vmem>>, vector<1x1x1x8x128xf32>
    %432 = vector.shape_cast %431 : vector<1x1x1x8x128xf32> to vector<8x128xf32>
    %433 = vector.shape_cast %430 : vector<8x128xf32> to vector<1x1x1x8x128xf32>
    tpu.vector_store %arg7[%c0_248, %c0_249, %c2_250, %c0_251, %c0_252], %433 {strides = array<i32>} : memref<1x1x6x8x128xf32, #tpu.memory_space<vmem>>, vector<1x1x1x8x128xf32>,
    %c0_253 = arith.constant 0 : index
    %c0_254 = arith.constant 0 : index
    %c3_255 = arith.constant 3 : index
    %c0_256 = arith.constant 0 : index
    %c0_257 = arith.constant 0 : index
    %434 = vector.load %arg7[%c0_253, %c0_254, %c3_255, %c0_256, %c0_257] : memref<1x1x6x8x128xf32, #tpu.memory_space<vmem>>, vector<1x1x1x8x128xf32>
    %435 = vector.shape_cast %434 : vector<1x1x1x8x128xf32> to vector<8x128xf32>
    %436 = arith.addf %435, %301 : vector<8x128xf32>
    %c0_258 = arith.constant 0 : index
    %c0_259 = arith.constant 0 : index
    %c3_260 = arith.constant 3 : index
    %c0_261 = arith.constant 0 : index
    %c0_262 = arith.constant 0 : index
    %437 = vector.load %arg7[%c0_258, %c0_259, %c3_260, %c0_261, %c0_262] : memref<1x1x6x8x128xf32, #tpu.memory_space<vmem>>, vector<1x1x1x8x128xf32>
    %438 = vector.shape_cast %437 : vector<1x1x1x8x128xf32> to vector<8x128xf32>
    %439 = vector.shape_cast %436 : vector<8x128xf32> to vector<1x1x1x8x128xf32>
    tpu.vector_store %arg7[%c0_258, %c0_259, %c3_260, %c0_261, %c0_262], %439 {strides = array<i32>} : memref<1x1x6x8x128xf32, #tpu.memory_space<vmem>>, vector<1x1x1x8x128xf32>,
    %c0_263 = arith.constant 0 : index
    %c0_264 = arith.constant 0 : index
    %c4_265 = arith.constant 4 : index
    %c0_266 = arith.constant 0 : index
    %c0_267 = arith.constant 0 : index
    %440 = vector.load %arg7[%c0_263, %c0_264, %c4_265, %c0_266, %c0_267] : memref<1x1x6x8x128xf32, #tpu.memory_space<vmem>>, vector<1x1x1x8x128xf32>
    %441 = vector.shape_cast %440 : vector<1x1x1x8x128xf32> to vector<8x128xf32>
    %442 = arith.addf %441, %414 : vector<8x128xf32>
    %c0_268 = arith.constant 0 : index
    %c0_269 = arith.constant 0 : index
    %c4_270 = arith.constant 4 : index
    %c0_271 = arith.constant 0 : index
    %c0_272 = arith.constant 0 : index
    %443 = vector.load %arg7[%c0_268, %c0_269, %c4_270, %c0_271, %c0_272] : memref<1x1x6x8x128xf32, #tpu.memory_space<vmem>>, vector<1x1x1x8x128xf32>
    %444 = vector.shape_cast %443 : vector<1x1x1x8x128xf32> to vector<8x128xf32>
    %445 = vector.shape_cast %442 : vector<8x128xf32> to vector<1x1x1x8x128xf32>
    tpu.vector_store %arg7[%c0_268, %c0_269, %c4_270, %c0_271, %c0_272], %445 {strides = array<i32>} : memref<1x1x6x8x128xf32, #tpu.memory_space<vmem>>, vector<1x1x1x8x128xf32>,
    %c0_273 = arith.constant 0 : index
    %c0_274 = arith.constant 0 : index
    %c5_275 = arith.constant 5 : index
    %c0_276 = arith.constant 0 : index
    %c0_277 = arith.constant 0 : index
    %446 = vector.load %arg7[%c0_273, %c0_274, %c5_275, %c0_276, %c0_277] : memref<1x1x6x8x128xf32, #tpu.memory_space<vmem>>, vector<1x1x1x8x128xf32>
    %447 = vector.shape_cast %446 : vector<1x1x1x8x128xf32> to vector<8x128xf32>
    %448 = arith.addf %447, %415 : vector<8x128xf32>
    %c0_278 = arith.constant 0 : index
    %c0_279 = arith.constant 0 : index
    %c5_280 = arith.constant 5 : index
    %c0_281 = arith.constant 0 : index
    %c0_282 = arith.constant 0 : index
    %449 = vector.load %arg7[%c0_278, %c0_279, %c5_280, %c0_281, %c0_282] : memref<1x1x6x8x128xf32, #tpu.memory_space<vmem>>, vector<1x1x1x8x128xf32>
    %450 = vector.shape_cast %449 : vector<1x1x1x8x128xf32> to vector<8x128xf32>
    %451 = vector.shape_cast %448 : vector<8x128xf32> to vector<1x1x1x8x128xf32>
    tpu.vector_store %arg7[%c0_278, %c0_279, %c5_280, %c0_281, %c0_282], %451 {strides = array<i32>} : memref<1x1x6x8x128xf32, #tpu.memory_space<vmem>>, vector<1x1x1x8x128xf32>,
    return
  }
  func.func @transform_0(%arg0: i32, %arg1: i32, %arg2: i32, %arg3: memref<2x128xf32, #tpu.memory_space<smem>>) -> (i32, i32, i32, i32) {
    %c1_i32 = arith.constant 1 : i32
    %0 = arith.muli %arg1, %c1_i32 : i32
    %1 = arith.addi %0, %arg2 : i32
    %c0_i32 = arith.constant 0 : i32
    %c0_i32_0 = arith.constant 0 : i32
    %c0_i32_1 = arith.constant 0 : i32
    return %arg0, %1, %c0_i32, %c0_i32_0 : i32, i32, i32, i32
  }
  func.func @transform_1(%arg0: i32, %arg1: i32, %arg2: i32, %arg3: memref<2x128xf32, #tpu.memory_space<smem>>) -> (i32, i32, i32, i32) {
    %c1_i32 = arith.constant 1 : i32
    %0 = arith.muli %arg1, %c1_i32 : i32
    %1 = arith.addi %0, %arg2 : i32
    %c0_i32 = arith.constant 0 : i32
    %c0_i32_0 = arith.constant 0 : i32
    %c0_i32_1 = arith.constant 0 : i32
    return %arg0, %1, %c0_i32, %c0_i32_0 : i32, i32, i32, i32
  }
  func.func @transform_2(%arg0: i32, %arg1: i32, %arg2: i32, %arg3: memref<2x128xf32, #tpu.memory_space<smem>>) -> (i32, i32, i32, i32) {
    %c1_i32 = arith.constant 1 : i32
    %0 = arith.muli %arg1, %c1_i32 : i32
    %1 = arith.addi %0, %arg2 : i32
    %c0_i32 = arith.constant 0 : i32
    %c0_i32_0 = arith.constant 0 : i32
    %c0_i32_1 = arith.constant 0 : i32
    return %arg0, %1, %c0_i32, %c0_i32_0 : i32, i32, i32, i32
  }
  func.func @transform_3(%arg0: i32, %arg1: i32, %arg2: i32, %arg3: memref<2x128xf32, #tpu.memory_space<smem>>) -> (i32, i32, i32, i32, i32) {
    %c0_i32 = arith.constant 0 : i32
    %c0_i32_0 = arith.constant 0 : i32
    %c0_i32_1 = arith.constant 0 : i32
    %c0_i32_2 = arith.constant 0 : i32
    return %arg0, %arg1, %c0_i32, %c0_i32_0, %c0_i32_1 : i32, i32, i32, i32, i32
  }
  func.func @transform_4(%arg0: i32, %arg1: i32, %arg2: i32, %arg3: memref<2x128xf32, #tpu.memory_space<smem>>) -> (i32, i32, i32, i32, i32) {
    %c0_i32 = arith.constant 0 : i32
    %c0_i32_0 = arith.constant 0 : i32
    %c0_i32_1 = arith.constant 0 : i32
    %c0_i32_2 = arith.constant 0 : i32
    return %arg0, %arg1, %c0_i32, %c0_i32_0, %c0_i32_1 : i32, i32, i32, i32, i32
  }
}

</mosaic_0001>

<llo_original>
// kernel: tpu_custom_call.1
$region0: #{tpu_custom_call.1}
  #allocation0 [shape = 'u32[]', space=smem, size = 0x4, offset = 0x4, fixed_abs, tag = 'smem constant byte address 0x4 - core index']
  #allocation1 [shape = 'u32[144,128]{1,0:T(1,128)}', space=vmem, size = 0x12000, scoped, tag = 'internal scratch']
  #allocation2 [shape = 's32[1]{0}', space=sflag, size = 0x4, scoped, tag = 'scoped memory for tpu_custom_call.1']
  #allocation3 [shape = 'u8[1024]{0}', space=smem, size = 0x400, scoped, tag = 'prefetched SMEM operand 0']
  %s0 = inlined_call_operand.hbm [shape: f32[2,128], index: 0, kind: input, shape index: {}]
  %s1 = inlined_call_operand.hbm [shape: f32[2,8,8,128], index: 1, kind: input, shape index: {}]
  %s2 = inlined_call_operand.hbm [shape: f32[2,8,8,128], index: 2, kind: input, shape index: {}]
  %s3 = inlined_call_operand.hbm [shape: f32[2,8,8,128], index: 3, kind: input, shape index: {}]
  %s4 = inlined_call_operand.hbm [shape: f32[2,1,6,8,128], index: 4, kind: output, shape index: {0}]
  %s5 = inlined_call_operand.hbm [shape: f32[2,1,256,8,128], index: 5, kind: output, shape index: {1}]
  %6 = xla_tuple %s4, %s5
  %s7 = sld [smem:[#allocation0]]
  $region83: #{tpu_custom_call.1} parent=0
    _
  %s9 = ssub.s32 1, %s7
  %s10 = scalar_select 0, %s9, %s7
  %12 = dma.hbm_to_smem %s0, 32, [#allocation3], [#allocation2]
  %13 = dma.done [#allocation2], 32
  %14 = sfence
  $region1: #{tpu_custom_call.1} parent=0
    #allocation4 [shape = 'u8[65536]{0}', space=vmem, size = 0x10000, scoped, tag = 'input window, operand 1']
    #allocation5 [shape = 's32[2]{0}', space=sflag, size = 0x8, scoped, tag = 'scoped memory for tpu_custom_call.1']
    #allocation6 [shape = 's32[2]{0}', space=sflag, size = 0x8, scoped, tag = 'scoped memory for tpu_custom_call.1']
    #allocation7 [shape = 'u8[65536]{0}', space=vmem, size = 0x10000, scoped, tag = 'input window, operand 2']
    #allocation8 [shape = 's32[2]{0}', space=sflag, size = 0x8, scoped, tag = 'scoped memory for tpu_custom_call.1']
    #allocation9 [shape = 'u8[65536]{0}', space=vmem, size = 0x10000, scoped, tag = 'input window, operand 3']
    #allocation10 [shape = 'u8[49152]{0}', space=vmem, size = 0xc000, scoped, tag = 'output window, operand 0']
    #allocation11 [shape = 'u8[2097152]{0}', space=vmem, size = 0x200000, scoped, tag = 'output window, operand 1']
    #allocation12 [shape = 's32[2]{0}', space=sflag, size = 0x8, scoped, tag = 'scoped memory for tpu_custom_call.1']
    %15 = vsyncpa [#allocation5], 0
    %s16 = scalar_lea.sflag [#allocation5], 1
    %17 = vsyncpa %s16, 0
    %18 = vsyncpa [#allocation8], 0
    %s19 = scalar_lea.sflag [#allocation8], 1
    %20 = vsyncpa %s19, 0
    %21 = vsyncpa [#allocation6], 0
    %s22 = scalar_lea.sflag [#allocation6], 1
    %23 = vsyncpa %s22, 0
    %24 = vsyncpa [#allocation12], 0
    %s25 = scalar_lea.sflag [#allocation12], 1
    %26 = vsyncpa %s25, 0
    loop: start=0, step=1, limit=4
    $region2: #{tpu_custom_call.1} parent=1 // loop_pre_header
      _
    $region3: #{tpu_custom_call.1} parent=1 // loop_header
      %s28 = sphi 0, %s32
      %p29 = scmp.ge.s32.totalorder %s28, 4
      %s35 = sphi 0, %s54
      %s36 = sphi 0, %s50
      %s37 = sphi 0, %s46
      %s38 = sphi 0, %s35
      %s39 = sphi 0, %s36
      %s40 = sphi 0, %s37
      %s41 = sphi 0, %s38
      %s42 = sphi 0, %s39
      %s43 = sphi 0, %s40
      %s61 = sphi 0, %s63
      %s64 = sphi 0, %s61
      %s65 = sphi 0, %s64
      %s81 = sphi 0, %s65
      %s91 = sphi 0, %s93
      %s94 = sphi 0, %s91
      %s95 = sphi 0, %s94
      %s111 = sphi 0, %s95
      %s121 = sphi 0, %s123
      %s124 = sphi 0, %s121
      %s125 = sphi 0, %s124
      %s141 = sphi 0, %s125
      %s149 = sphi 0, %s151
      %s152 = sphi 0, %s149
      %s153 = sphi 0, %s152
      %s169 = sphi 0, %s153
      %s177 = sphi 0, %s179
      %s180 = sphi 0, %s177
      %s181 = sphi 0, %s180
      %s197 = sphi 0, %s181
    $region4: #{tpu_custom_call.1} parent=1 // loop_header_branch
      %31 = sbr.rel (%p29) target = $region8
    $region5: #{tpu_custom_call.1} parent=1 // loop_body
      %s33 = ssub.s32 %s28, 1
      %s34 = ssub.s32 %s28, 2
      %s44 = sadd.s32 1, %s37
      %p45 = scmp.ge.s32.totalorder %s44, 1
      %s46 = scalar_select %p45, 0, %s44
      %s47 = sadd.s32 1, %s36
      %s48 = scalar_select %p45, %s47, %s36
      %p49 = scmp.ge.s32.totalorder %s48, 1
      %s50 = scalar_select %p49, 0, %s48
      %s51 = sadd.s32 1, %s35
      %s52 = scalar_select %p49, %s51, %s35
      %p53 = scmp.ge.s32.totalorder %s52, 2
      %s54 = scalar_select %p53, 0, %s52
      %s55 = sadd.s32 %s36, %s37
      %s56 = sadd.s32 %s50, %s46
      %s57 = ssub.s32 %s35, %s54
      %s58 = ssub.s32 %s55, %s56
      %s59 = sor.u32 %s57, %s58
      %p60 = scmp.eq.s32.totalorder %s59, 0
      %s62 = sadd.s32 %s61, 1
      %s63 = scalar_select %p60, %s61, %s62
      %p66 = pneg %p60
      %p67 = scmp.eq.s32.totalorder %s28, 1
      %p68 = por %p66, %p67
      %p69 = scmp.ne.s32.totalorder %s61, %s64
      %p70 = scmp.eq.s32.totalorder %s28, 0
      %p71 = por %p69, %p70
      %p72 = scmp.ne.s32.totalorder %s61, %s64
      %p73 = scmp.eq.s32.totalorder %s33, 1
      %p74 = por %p72, %p73
      %p75 = scmp.ne.s32.totalorder %s64, %s65
      %p76 = scmp.eq.s32.totalorder %s33, 0
      %p77 = por %p75, %p76
      %p78 = scmp.ne.s32.totalorder %s64, %s65
      %p79 = scmp.eq.s32.totalorder %s34, 1
      %p80 = por %p78, %p79
      %p82 = scmp.ne.s32.totalorder %s65, %s81
      %p83 = scmp.eq.s32.totalorder %s34, 0
      %p84 = por %p82, %p83
      %s85 = sadd.s32 %s36, %s37
      %s86 = sadd.s32 %s50, %s46
      %s87 = ssub.s32 %s35, %s54
      %s88 = ssub.s32 %s85, %s86
      %s89 = sor.u32 %s87, %s88
      %p90 = scmp.eq.s32.totalorder %s89, 0
      %s92 = sadd.s32 %s91, 1
      %s93 = scalar_select %p90, %s91, %s92
      %p96 = pneg %p90
      %p97 = scmp.eq.s32.totalorder %s28, 1
      %p98 = por %p96, %p97
      %p99 = scmp.ne.s32.totalorder %s91, %s94
      %p100 = scmp.eq.s32.totalorder %s28, 0
      %p101 = por %p99, %p100
      %p102 = scmp.ne.s32.totalorder %s91, %s94
      %p103 = scmp.eq.s32.totalorder %s33, 1
      %p104 = por %p102, %p103
      %p105 = scmp.ne.s32.totalorder %s94, %s95
      %p106 = scmp.eq.s32.totalorder %s33, 0
      %p107 = por %p105, %p106
      %p108 = scmp.ne.s32.totalorder %s94, %s95
      %p109 = scmp.eq.s32.totalorder %s34, 1
      %p110 = por %p108, %p109
      %p112 = scmp.ne.s32.totalorder %s95, %s111
      %p113 = scmp.eq.s32.totalorder %s34, 0
      %p114 = por %p112, %p113
      %s115 = sadd.s32 %s36, %s37
      %s116 = sadd.s32 %s50, %s46
      %s117 = ssub.s32 %s35, %s54
      %s118 = ssub.s32 %s115, %s116
      %s119 = sor.u32 %s117, %s118
      %p120 = scmp.eq.s32.totalorder %s119, 0
      %s122 = sadd.s32 %s121, 1
      %s123 = scalar_select %p120, %s121, %s122
      %p126 = pneg %p120
      %p127 = scmp.eq.s32.totalorder %s28, 1
      %p128 = por %p126, %p127
      %p129 = scmp.ne.s32.totalorder %s121, %s124
      %p130 = scmp.eq.s32.totalorder %s28, 0
      %p131 = por %p129, %p130
      %p132 = scmp.ne.s32.totalorder %s121, %s124
      %p133 = scmp.eq.s32.totalorder %s33, 1
      %p134 = por %p132, %p133
      %p135 = scmp.ne.s32.totalorder %s124, %s125
      %p136 = scmp.eq.s32.totalorder %s33, 0
      %p137 = por %p135, %p136
      %p138 = scmp.ne.s32.totalorder %s124, %s125
      %p139 = scmp.eq.s32.totalorder %s34, 1
      %p140 = por %p138, %p139
      %p142 = scmp.ne.s32.totalorder %s125, %s141
      %p143 = scmp.eq.s32.totalorder %s34, 0
      %p144 = por %p142, %p143
      %s145 = ssub.s32 %s35, %s54
      %s146 = ssub.s32 %s36, %s50
      %s147 = sor.u32 %s145, %s146
      %p148 = scmp.eq.s32.totalorder %s147, 0
      %s150 = sadd.s32 %s149, 1
      %s151 = scalar_select %p148, %s149, %s150
      %p154 = pneg %p148
      %p155 = scmp.eq.s32.totalorder %s28, 1
      %p156 = por %p154, %p155
      %p157 = scmp.ne.s32.totalorder %s149, %s152
      %p158 = scmp.eq.s32.totalorder %s28, 0
      %p159 = por %p157, %p158
      %p160 = scmp.ne.s32.totalorder %s149, %s152
      %p161 = scmp.eq.s32.totalorder %s33, 1
      %p162 = por %p160, %p161
      %p163 = scmp.ne.s32.totalorder %s152, %s153
      %p164 = scmp.eq.s32.totalorder %s33, 0
      %p165 = por %p163, %p164
      %p166 = scmp.ne.s32.totalorder %s152, %s153
      %p167 = scmp.eq.s32.totalorder %s34, 1
      %p168 = por %p166, %p167
      %p170 = scmp.ne.s32.totalorder %s153, %s169
      %p171 = scmp.eq.s32.totalorder %s34, 0
      %p172 = por %p170, %p171
      %s173 = ssub.s32 %s35, %s54
      %s174 = ssub.s32 %s36, %s50
      %s175 = sor.u32 %s173, %s174
      %p176 = scmp.eq.s32.totalorder %s175, 0
      %s178 = sadd.s32 %s177, 1
      %s179 = scalar_select %p176, %s177, %s178
      %p182 = pneg %p176
      %p183 = scmp.eq.s32.totalorder %s28, 1
      %p184 = por %p182, %p183
      %p185 = scmp.ne.s32.totalorder %s177, %s180
      %p186 = scmp.eq.s32.totalorder %s28, 0
      %p187 = por %p185, %p186
      %p188 = scmp.ne.s32.totalorder %s177, %s180
      %p189 = scmp.eq.s32.totalorder %s33, 1
      %p190 = por %p188, %p189
      %p191 = scmp.ne.s32.totalorder %s180, %s181
      %p192 = scmp.eq.s32.totalorder %s33, 0
      %p193 = por %p191, %p192
      %p194 = scmp.ne.s32.totalorder %s180, %s181
      %p195 = scmp.eq.s32.totalorder %s34, 1
      %p196 = por %p194, %p195
      %p198 = scmp.ne.s32.totalorder %s181, %s197
      %p199 = scmp.eq.s32.totalorder %s34, 0
      %p200 = por %p198, %p199
      %p201 = scmp.le.s32.totalorder 1, %s28
      %p202 = scmp.lt.s32.totalorder %s28, 3
      %p203 = pnand %p201, %p202
      %p204 = pneg %p203
      // Predicated region
      $region9: #{tpu_custom_call.1} parent=5 // pred_check
        _
      $region10: #{tpu_custom_call.1} parent=5 // pred_check_branch
        %206 = sbr.rel (%p203) target = $region12
      $region11: #{tpu_custom_call.1} parent=5 // pred_region
        %s207 = ssub.s32 %s28, 1
      $region12: #{tpu_custom_call.1} parent=5 // pred_fallthru
        _
      %p208 = scmp.lt.s32.totalorder %s28, 2
      // Predicated region
      $region13: #{tpu_custom_call.1} parent=5 // pred_check
        %p209 = pneg %p208
      $region14: #{tpu_custom_call.1} parent=5 // pred_check_branch
        %211 = sbr.rel (%p209) target = $region16
      $region15: #{tpu_custom_call.1} parent=5 // pred_region
        // Predicated region
        $region17: #{tpu_custom_call.1} parent=15 // pred_check
          %p212 = pneg %p71
        $region18: #{tpu_custom_call.1} parent=15 // pred_check_branch
          %214 = sbr.rel (%p212) target = $region20
        $region19: #{tpu_custom_call.1} parent=15 // pred_region
          %s215 = sand.u32 %s61, 1
          %s216 = scalar_lea.sflag [#allocation5], %s215
          %s217 = sand.u32 %s61, 1
          %s218 = smul.addr %s217, 64
          %s219 = scalar_lea.vmem [#allocation4], %s218
          %s220 = sadd.s32 %s36, %s37
          %s221 = smul.u32 8, %s220
          %s223 = ssub.s32 1024, 1024
          %224 = vsyncadd %s216, %s223
          %s225 = smul.addr %s35, 8
          %s226 = sadd.s32 %s221, %s225
          %s227 = smul.addr %s226, 128
          %s228 = scalar_lea.hbm %s1, %s227
          %s229 = sshll.u32 %s219, 4
          %s230 = int_to_ptr.vmem [resolvable:$true] %s229
          %235 = dma.hbm_to_vmem [thread:$0]  %s228, 1024, %s230, %s216, 128, 128, 8
        $region20: #{tpu_custom_call.1} parent=15 // pred_fallthru
          _
        // Predicated region
        $region21: #{tpu_custom_call.1} parent=15 // pred_check
          %p236 = pneg %p101
        $region22: #{tpu_custom_call.1} parent=15 // pred_check_branch
          %238 = sbr.rel (%p236) target = $region24
        $region23: #{tpu_custom_call.1} parent=15 // pred_region
          %s239 = sand.u32 %s28, 1
          %s240 = scalar_lea.sflag [#allocation8], %s239
          %s241 = sand.u32 %s91, 1
          %s242 = smul.addr %s241, 64
          %s243 = scalar_lea.vmem [#allocation7], %s242
          %s244 = sadd.s32 %s36, %s37
          %s245 = smul.u32 8, %s244
          %s247 = ssub.s32 1024, 1024
          %248 = vsyncadd %s240, %s247
          %s249 = smul.addr %s35, 8
          %s250 = sadd.s32 %s245, %s249
          %s251 = smul.addr %s250, 128
          %s252 = scalar_lea.hbm %s2, %s251
          %s253 = sshll.u32 %s243, 4
          %s254 = int_to_ptr.vmem [resolvable:$true] %s253
          %259 = dma.hbm_to_vmem [thread:$0]  %s252, 1024, %s254, %s240, 128, 128, 8
        $region24: #{tpu_custom_call.1} parent=15 // pred_fallthru
          _
        // Predicated region
        $region25: #{tpu_custom_call.1} parent=15 // pred_check
          %p260 = pneg %p131
        $region26: #{tpu_custom_call.1} parent=15 // pred_check_branch
          %262 = sbr.rel (%p260) target = $region28
        $region27: #{tpu_custom_call.1} parent=15 // pred_region
          %s263 = sand.u32 %s28, 1
          %s264 = scalar_lea.sflag [#allocation8], %s263
          %s265 = sand.u32 %s121, 1
          %s266 = smul.addr %s265, 64
          %s267 = scalar_lea.vmem [#allocation9], %s266
          %s268 = sadd.s32 %s36, %s37
          %s269 = smul.u32 8, %s268
          %s271 = ssub.s32 1024, 1024
          %272 = vsyncadd %s264, %s271
          %s273 = smul.addr %s35, 8
          %s274 = sadd.s32 %s269, %s273
          %s275 = smul.addr %s274, 128
          %s276 = scalar_lea.hbm %s3, %s275
          %s277 = sshll.u32 %s267, 4
          %s278 = int_to_ptr.vmem [resolvable:$true] %s277
          %283 = dma.hbm_to_vmem [thread:$0]  %s276, 1024, %s278, %s264, 128, 128, 8
        $region28: #{tpu_custom_call.1} parent=15 // pred_fallthru
          _
      $region16: #{tpu_custom_call.1} parent=5 // pred_fallthru
        _
      %p284 = scmp.le.s32.totalorder 1, %s28
      %p285 = scmp.lt.s32.totalorder %s28, 3
      %p286 = pnand %p284, %p285
      %p287 = pneg %p286
      // Predicated region
      $region29: #{tpu_custom_call.1} parent=5 // pred_check
        _
      $region30: #{tpu_custom_call.1} parent=5 // pred_check_branch
        %289 = sbr.rel (%p286) target = $region32
      $region31: #{tpu_custom_call.1} parent=5 // pred_region
        %s290 = ssub.s32 %s28, 1
        %s291 = sand.u32 %s64, 1
        %s292 = scalar_lea.sflag [#allocation5], %s291
        %s293 = sand.u32 %s64, 1
        %s294 = smul.addr %s293, 64
        %s295 = scalar_lea.vmem [#allocation4], %s294
        // Predicated region
        $region33: #{tpu_custom_call.1} parent=31 // pred_check
          %p296 = pneg %p77
        $region34: #{tpu_custom_call.1} parent=31 // pred_check_branch
          %298 = sbr.rel (%p296) target = $region36
        $region35: #{tpu_custom_call.1} parent=31 // pred_region
          %299 = dma.done %s292, 1024
        $region36: #{tpu_custom_call.1} parent=31 // pred_fallthru
          _
        %s300 = sand.u32 %s33, 1
        %s301 = scalar_lea.sflag [#allocation8], %s300
        %s302 = sand.u32 %s94, 1
        %s303 = smul.addr %s302, 64
        %s304 = scalar_lea.vmem [#allocation7], %s303
        // Predicated region
        $region37: #{tpu_custom_call.1} parent=31 // pred_check
          %p305 = pneg %p107
        $region38: #{tpu_custom_call.1} parent=31 // pred_check_branch
          %307 = sbr.rel (%p305) target = $region40
        $region39: #{tpu_custom_call.1} parent=31 // pred_region
          %308 = dma.done %s301, 1024
        $region40: #{tpu_custom_call.1} parent=31 // pred_fallthru
          _
        %s309 = sand.u32 %s33, 1
        %s310 = scalar_lea.sflag [#allocation8], %s309
        %s311 = sand.u32 %s124, 1
        %s312 = smul.addr %s311, 64
        %s313 = scalar_lea.vmem [#allocation9], %s312
        // Predicated region
        $region41: #{tpu_custom_call.1} parent=31 // pred_check
          %p314 = pneg %p137
        $region42: #{tpu_custom_call.1} parent=31 // pred_check_branch
          %316 = sbr.rel (%p314) target = $region44
        $region43: #{tpu_custom_call.1} parent=31 // pred_region
          %317 = dma.done %s310, 1024
        $region44: #{tpu_custom_call.1} parent=31 // pred_fallthru
          _
        %s318 = sand.u32 %s64, 1
        %s319 = scalar_lea.sflag [#allocation5], %s318
        %s320 = sand.u32 %s64, 1
        %s321 = smul.addr %s320, 64
        %s322 = scalar_lea.vmem [#allocation4], %s321
        %p323 = pneg %p77
        %p324 = pneg %p74
        %s325 = sand.u32 %s33, 1
        %s326 = scalar_lea.sflag [#allocation8], %s325
        %s327 = sand.u32 %s94, 1
        %s328 = smul.addr %s327, 64
        %s329 = scalar_lea.vmem [#allocation7], %s328
        %p330 = pneg %p107
        %p331 = pneg %p104
        %s332 = sand.u32 %s33, 1
        %s333 = scalar_lea.sflag [#allocation8], %s332
        %s334 = sand.u32 %s124, 1
        %s335 = smul.addr %s334, 64
        %s336 = scalar_lea.vmem [#allocation9], %s335
        %p337 = pneg %p137
        %p338 = pneg %p134
        %p339 = pneg %p165
        %p340 = pneg %p162
        %s341 = sand.u32 %s152, 1
        %s342 = scalar_lea.sflag [#allocation6], %s341
        %s343 = sand.u32 %s152, 1
        %s344 = smul.addr %s343, 48
        %s345 = scalar_lea.vmem [#allocation10], %s344
        %p346 = pneg %p193
        %p347 = pneg %p190
        %s348 = sand.u32 %s180, 1
        %s349 = scalar_lea.sflag [#allocation12], %s348
        %s350 = sand.u32 %s180, 1
        %s351 = smul.addr %s350, 2048
        %s352 = scalar_lea.vmem [#allocation11], %s351
        %s353 = sadd.s32 %s39, %s40
        %s354 = smul.u32 8, %s353
        %s355 = sadd.s32 %s39, %s40
        %s356 = smul.u32 8, %s355
        %s357 = sadd.s32 %s39, %s40
        %s358 = smul.u32 8, %s357
        %p359 = scmp.eq.s32.totalorder %s40, 0
        // Predicated region
        $region45: #{tpu_custom_call.1} parent=31 // pred_check
          %p360 = pneg %p359
        $region46: #{tpu_custom_call.1} parent=31 // pred_check_branch
          %362 = sbr.rel (%p360) target = $region48
        $region47: #{tpu_custom_call.1} parent=31 // pred_region
          %363 = vst [vmem:[%s345] sm:$0xff] 0.0
          %364 = vst [vmem:[%s345 + $0x8] sm:$0xff] 0.0
          %365 = vst [vmem:[%s345 + $0x10] sm:$0xff] 0.0
          %366 = vst [vmem:[%s345 + $0x18] sm:$0xff] 0.0
          %367 = vst [vmem:[%s345 + $0x20] sm:$0xff] 0.0
          %368 = vst [vmem:[%s345 + $0x28] sm:$0xff] 0.0
          %369 = vst [vmem:[%s352] sm:$0xff] 1e+30
          %370 = vst [vmem:[%s352 + $0x8] sm:$0xff] 1e+30
          %371 = vst [vmem:[%s352 + $0x10] sm:$0xff] 1e+30
          %372 = vst [vmem:[%s352 + $0x18] sm:$0xff] 1e+30
          %373 = vst [vmem:[%s352 + $0x20] sm:$0xff] 1e+30
          %374 = vst [vmem:[%s352 + $0x28] sm:$0xff] 1e+30
          %375 = vst [vmem:[%s352 + $0x30] sm:$0xff] 1e+30
          %376 = vst [vmem:[%s352 + $0x38] sm:$0xff] 1e+30
          %377 = vst [vmem:[%s352 + $0x40] sm:$0xff] 1e+30
          %378 = vst [vmem:[%s352 + $0x48] sm:$0xff] 1e+30
          %379 = vst [vmem:[%s352 + $0x50] sm:$0xff] 1e+30
          %380 = vst [vmem:[%s352 + $0x58] sm:$0xff] 1e+30
          %381 = vst [vmem:[%s352 + $0x60] sm:$0xff] 1e+30
          %382 = vst [vmem:[%s352 + $0x68] sm:$0xff] 1e+30
          %383 = vst [vmem:[%s352 + $0x70] sm:$0xff] 1e+30
          %384 = vst [vmem:[%s352 + $0x78] sm:$0xff] 1e+30
          %385 = vst [vmem:[%s352 + $0x80] sm:$0xff] 1e+30
          %386 = vst [vmem:[%s352 + $0x88] sm:$0xff] 1e+30
          %387 = vst [vmem:[%s352 + $0x90] sm:$0xff] 1e+30
          %388 = vst [vmem:[%s352 + $0x98] sm:$0xff] 1e+30
          %389 = vst [vmem:[%s352 + $0xa0] sm:$0xff] 1e+30
          %390 = vst [vmem:[%s352 + $0xa8] sm:$0xff] 1e+30
          %391 = vst [vmem:[%s352 + $0xb0] sm:$0xff] 1e+30
          %392 = vst [vmem:[%s352 + $0xb8] sm:$0xff] 1e+30
          %393 = vst [vmem:[%s352 + $0xc0] sm:$0xff] 1e+30
          %394 = vst [vmem:[%s352 + $0xc8] sm:$0xff] 1e+30
          %395 = vst [vmem:[%s352 + $0xd0] sm:$0xff] 1e+30
          %396 = vst [vmem:[%s352 + $0xd8] sm:$0xff] 1e+30
          %397 = vst [vmem:[%s352 + $0xe0] sm:$0xff] 1e+30
          %398 = vst [vmem:[%s352 + $0xe8] sm:$0xff] 1e+30
          %399 = vst [vmem:[%s352 + $0xf0] sm:$0xff] 1e+30
          %400 = vst [vmem:[%s352 + $0xf8] sm:$0xff] 1e+30
          %401 = vst [vmem:[%s352 + $0x100] sm:$0xff] 1e+30
          %402 = vst [vmem:[%s352 + $0x108] sm:$0xff] 1e+30
          %403 = vst [vmem:[%s352 + $0x110] sm:$0xff] 1e+30
          %404 = vst [vmem:[%s352 + $0x118] sm:$0xff] 1e+30
          %405 = vst [vmem:[%s352 + $0x120] sm:$0xff] 1e+30
          %406 = vst [vmem:[%s352 + $0x128] sm:$0xff] 1e+30
          %407 = vst [vmem:[%s352 + $0x130] sm:$0xff] 1e+30
          %408 = vst [vmem:[%s352 + $0x138] sm:$0xff] 1e+30
          %409 = vst [vmem:[%s352 + $0x140] sm:$0xff] 1e+30
          %410 = vst [vmem:[%s352 + $0x148] sm:$0xff] 1e+30
          %411 = vst [vmem:[%s352 + $0x150] sm:$0xff] 1e+30
          %412 = vst [vmem:[%s352 + $0x158] sm:$0xff] 1e+30
          %413 = vst [vmem:[%s352 + $0x160] sm:$0xff] 1e+30
          %414 = vst [vmem:[%s352 + $0x168] sm:$0xff] 1e+30
          %415 = vst [vmem:[%s352 + $0x170] sm:$0xff] 1e+30
          %416 = vst [vmem:[%s352 + $0x178] sm:$0xff] 1e+30
          %417 = vst [vmem:[%s352 + $0x180] sm:$0xff] 1e+30
          %418 = vst [vmem:[%s352 + $0x188] sm:$0xff] 1e+30
          %419 = vst [vmem:[%s352 + $0x190] sm:$0xff] 1e+30
          %420 = vst [vmem:[%s352 + $0x198] sm:$0xff] 1e+30
          %421 = vst [vmem:[%s352 + $0x1a0] sm:$0xff] 1e+30
          %422 = vst [vmem:[%s352 + $0x1a8] sm:$0xff] 1e+30
          %423 = vst [vmem:[%s352 + $0x1b0] sm:$0xff] 1e+30
          %424 = vst [vmem:[%s352 + $0x1b8] sm:$0xff] 1e+30
          %425 = vst [vmem:[%s352 + $0x1c0] sm:$0xff] 1e+30
          %426 = vst [vmem:[%s352 + $0x1c8] sm:$0xff] 1e+30
          %427 = vst [vmem:[%s352 + $0x1d0] sm:$0xff] 1e+30
          %428 = vst [vmem:[%s352 + $0x1d8] sm:$0xff] 1e+30
          %429 = vst [vmem:[%s352 + $0x1e0] sm:$0xff] 1e+30
          %430 = vst [vmem:[%s352 + $0x1e8] sm:$0xff] 1e+30
          %431 = vst [vmem:[%s352 + $0x1f0] sm:$0xff] 1e+30
          %432 = vst [vmem:[%s352 + $0x1f8] sm:$0xff] 1e+30
          %433 = vst [vmem:[%s352 + $0x200] sm:$0xff] 1e+30
          %434 = vst [vmem:[%s352 + $0x208] sm:$0xff] 1e+30
          %435 = vst [vmem:[%s352 + $0x210] sm:$0xff] 1e+30
          %436 = vst [vmem:[%s352 + $0x218] sm:$0xff] 1e+30
          %437 = vst [vmem:[%s352 + $0x220] sm:$0xff] 1e+30
          %438 = vst [vmem:[%s352 + $0x228] sm:$0xff] 1e+30
          %439 = vst [vmem:[%s352 + $0x230] sm:$0xff] 1e+30
          %440 = vst [vmem:[%s352 + $0x238] sm:$0xff] 1e+30
          %441 = vst [vmem:[%s352 + $0x240] sm:$0xff] 1e+30
          %442 = vst [vmem:[%s352 + $0x248] sm:$0xff] 1e+30
          %443 = vst [vmem:[%s352 + $0x250] sm:$0xff] 1e+30
          %444 = vst [vmem:[%s352 + $0x258] sm:$0xff] 1e+30
          %445 = vst [vmem:[%s352 + $0x260] sm:$0xff] 1e+30
          %446 = vst [vmem:[%s352 + $0x268] sm:$0xff] 1e+30
          %447 = vst [vmem:[%s352 + $0x270] sm:$0xff] 1e+30
          %448 = vst [vmem:[%s352 + $0x278] sm:$0xff] 1e+30
          %449 = vst [vmem:[%s352 + $0x280] sm:$0xff] 1e+30
          %450 = vst [vmem:[%s352 + $0x288] sm:$0xff] 1e+30
          %451 = vst [vmem:[%s352 + $0x290] sm:$0xff] 1e+30
          %452 = vst [vmem:[%s352 + $0x298] sm:$0xff] 1e+30
          %453 = vst [vmem:[%s352 + $0x2a0] sm:$0xff] 1e+30
          %454 = vst [vmem:[%s352 + $0x2a8] sm:$0xff] 1e+30
          %455 = vst [vmem:[%s352 + $0x2b0] sm:$0xff] 1e+30
          %456 = vst [vmem:[%s352 + $0x2b8] sm:$0xff] 1e+30
          %457 = vst [vmem:[%s352 + $0x2c0] sm:$0xff] 1e+30
          %458 = vst [vmem:[%s352 + $0x2c8] sm:$0xff] 1e+30
          %459 = vst [vmem:[%s352 + $0x2d0] sm:$0xff] 1e+30
          %460 = vst [vmem:[%s352 + $0x2d8] sm:$0xff] 1e+30
          %461 = vst [vmem:[%s352 + $0x2e0] sm:$0xff] 1e+30
          %462 = vst [vmem:[%s352 + $0x2e8] sm:$0xff] 1e+30
          %463 = vst [vmem:[%s352 + $0x2f0] sm:$0xff] 1e+30
          %464 = vst [vmem:[%s352 + $0x2f8] sm:$0xff] 1e+30
          %465 = vst [vmem:[%s352 + $0x300] sm:$0xff] 1e+30
          %466 = vst [vmem:[%s352 + $0x308] sm:$0xff] 1e+30
          %467 = vst [vmem:[%s352 + $0x310] sm:$0xff] 1e+30
          %468 = vst [vmem:[%s352 + $0x318] sm:$0xff] 1e+30
          %469 = vst [vmem:[%s352 + $0x320] sm:$0xff] 1e+30
          %470 = vst [vmem:[%s352 + $0x328] sm:$0xff] 1e+30
          %471 = vst [vmem:[%s352 + $0x330] sm:$0xff] 1e+30
          %472 = vst [vmem:[%s352 + $0x338] sm:$0xff] 1e+30
          %473 = vst [vmem:[%s352 + $0x340] sm:$0xff] 1e+30
          %474 = vst [vmem:[%s352 + $0x348] sm:$0xff] 1e+30
          %475 = vst [vmem:[%s352 + $0x350] sm:$0xff] 1e+30
          %476 = vst [vmem:[%s352 + $0x358] sm:$0xff] 1e+30
          %477 = vst [vmem:[%s352 + $0x360] sm:$0xff] 1e+30
          %478 = vst [vmem:[%s352 + $0x368] sm:$0xff] 1e+30
          %479 = vst [vmem:[%s352 + $0x370] sm:$0xff] 1e+30
          %480 = vst [vmem:[%s352 + $0x378] sm:$0xff] 1e+30
          %481 = vst [vmem:[%s352 + $0x380] sm:$0xff] 1e+30
          %482 = vst [vmem:[%s352 + $0x388] sm:$0xff] 1e+30
          %483 = vst [vmem:[%s352 + $0x390] sm:$0xff] 1e+30
          %484 = vst [vmem:[%s352 + $0x398] sm:$0xff] 1e+30
          %485 = vst [vmem:[%s352 + $0x3a0] sm:$0xff] 1e+30
          %486 = vst [vmem:[%s352 + $0x3a8] sm:$0xff] 1e+30
          %487 = vst [vmem:[%s352 + $0x3b0] sm:$0xff] 1e+30
          %488 = vst [vmem:[%s352 + $0x3b8] sm:$0xff] 1e+30
          %489 = vst [vmem:[%s352 + $0x3c0] sm:$0xff] 1e+30
          %490 = vst [vmem:[%s352 + $0x3c8] sm:$0xff] 1e+30
          %491 = vst [vmem:[%s352 + $0x3d0] sm:$0xff] 1e+30
          %492 = vst [vmem:[%s352 + $0x3d8] sm:$0xff] 1e+30
          %493 = vst [vmem:[%s352 + $0x3e0] sm:$0xff] 1e+30
          %494 = vst [vmem:[%s352 + $0x3e8] sm:$0xff] 1e+30
          %495 = vst [vmem:[%s352 + $0x3f0] sm:$0xff] 1e+30
          %496 = vst [vmem:[%s352 + $0x3f8] sm:$0xff] 1e+30
          %497 = vst [vmem:[%s352 + $0x400] sm:$0xff] 1e+30
          %498 = vst [vmem:[%s352 + $0x408] sm:$0xff] 1e+30
          %499 = vst [vmem:[%s352 + $0x410] sm:$0xff] 1e+30
          %500 = vst [vmem:[%s352 + $0x418] sm:$0xff] 1e+30
          %501 = vst [vmem:[%s352 + $0x420] sm:$0xff] 1e+30
          %502 = vst [vmem:[%s352 + $0x428] sm:$0xff] 1e+30
          %503 = vst [vmem:[%s352 + $0x430] sm:$0xff] 1e+30
          %504 = vst [vmem:[%s352 + $0x438] sm:$0xff] 1e+30
          %505 = vst [vmem:[%s352 + $0x440] sm:$0xff] 1e+30
          %506 = vst [vmem:[%s352 + $0x448] sm:$0xff] 1e+30
          %507 = vst [vmem:[%s352 + $0x450] sm:$0xff] 1e+30
          %508 = vst [vmem:[%s352 + $0x458] sm:$0xff] 1e+30
          %509 = vst [vmem:[%s352 + $0x460] sm:$0xff] 1e+30
          %510 = vst [vmem:[%s352 + $0x468] sm:$0xff] 1e+30
          %511 = vst [vmem:[%s352 + $0x470] sm:$0xff] 1e+30
          %512 = vst [vmem:[%s352 + $0x478] sm:$0xff] 1e+30
          %513 = vst [vmem:[%s352 + $0x480] sm:$0xff] 1e+30
          %514 = vst [vmem:[%s352 + $0x488] sm:$0xff] 1e+30
          %515 = vst [vmem:[%s352 + $0x490] sm:$0xff] 1e+30
          %516 = vst [vmem:[%s352 + $0x498] sm:$0xff] 1e+30
          %517 = vst [vmem:[%s352 + $0x4a0] sm:$0xff] 1e+30
          %518 = vst [vmem:[%s352 + $0x4a8] sm:$0xff] 1e+30
          %519 = vst [vmem:[%s352 + $0x4b0] sm:$0xff] 1e+30
          %520 = vst [vmem:[%s352 + $0x4b8] sm:$0xff] 1e+30
          %521 = vst [vmem:[%s352 + $0x4c0] sm:$0xff] 1e+30
          %522 = vst [vmem:[%s352 + $0x4c8] sm:$0xff] 1e+30
          %523 = vst [vmem:[%s352 + $0x4d0] sm:$0xff] 1e+30
          %524 = vst [vmem:[%s352 + $0x4d8] sm:$0xff] 1e+30
          %525 = vst [vmem:[%s352 + $0x4e0] sm:$0xff] 1e+30
          %526 = vst [vmem:[%s352 + $0x4e8] sm:$0xff] 1e+30
          %527 = vst [vmem:[%s352 + $0x4f0] sm:$0xff] 1e+30
          %528 = vst [vmem:[%s352 + $0x4f8] sm:$0xff] 1e+30
          %529 = vst [vmem:[%s352 + $0x500] sm:$0xff] 1e+30
          %530 = vst [vmem:[%s352 + $0x508] sm:$0xff] 1e+30
          %531 = vst [vmem:[%s352 + $0x510] sm:$0xff] 1e+30
          %532 = vst [vmem:[%s352 + $0x518] sm:$0xff] 1e+30
          %533 = vst [vmem:[%s352 + $0x520] sm:$0xff] 1e+30
          %534 = vst [vmem:[%s352 + $0x528] sm:$0xff] 1e+30
          %535 = vst [vmem:[%s352 + $0x530] sm:$0xff] 1e+30
          %536 = vst [vmem:[%s352 + $0x538] sm:$0xff] 1e+30
          %537 = vst [vmem:[%s352 + $0x540] sm:$0xff] 1e+30
          %538 = vst [vmem:[%s352 + $0x548] sm:$0xff] 1e+30
          %539 = vst [vmem:[%s352 + $0x550] sm:$0xff] 1e+30
          %540 = vst [vmem:[%s352 + $0x558] sm:$0xff] 1e+30
          %541 = vst [vmem:[%s352 + $0x560] sm:$0xff] 1e+30
          %542 = vst [vmem:[%s352 + $0x568] sm:$0xff] 1e+30
          %543 = vst [vmem:[%s352 + $0x570] sm:$0xff] 1e+30
          %544 = vst [vmem:[%s352 + $0x578] sm:$0xff] 1e+30
          %545 = vst [vmem:[%s352 + $0x580] sm:$0xff] 1e+30
          %546 = vst [vmem:[%s352 + $0x588] sm:$0xff] 1e+30
          %547 = vst [vmem:[%s352 + $0x590] sm:$0xff] 1e+30
          %548 = vst [vmem:[%s352 + $0x598] sm:$0xff] 1e+30
          %549 = vst [vmem:[%s352 + $0x5a0] sm:$0xff] 1e+30
          %550 = vst [vmem:[%s352 + $0x5a8] sm:$0xff] 1e+30
          %551 = vst [vmem:[%s352 + $0x5b0] sm:$0xff] 1e+30
          %552 = vst [vmem:[%s352 + $0x5b8] sm:$0xff] 1e+30
          %553 = vst [vmem:[%s352 + $0x5c0] sm:$0xff] 1e+30
          %554 = vst [vmem:[%s352 + $0x5c8] sm:$0xff] 1e+30
          %555 = vst [vmem:[%s352 + $0x5d0] sm:$0xff] 1e+30
          %556 = vst [vmem:[%s352 + $0x5d8] sm:$0xff] 1e+30
          %557 = vst [vmem:[%s352 + $0x5e0] sm:$0xff] 1e+30
          %558 = vst [vmem:[%s352 + $0x5e8] sm:$0xff] 1e+30
          %559 = vst [vmem:[%s352 + $0x5f0] sm:$0xff] 1e+30
          %560 = vst [vmem:[%s352 + $0x5f8] sm:$0xff] 1e+30
          %561 = vst [vmem:[%s352 + $0x600] sm:$0xff] 1e+30
          %562 = vst [vmem:[%s352 + $0x608] sm:$0xff] 1e+30
          %563 = vst [vmem:[%s352 + $0x610] sm:$0xff] 1e+30
          %564 = vst [vmem:[%s352 + $0x618] sm:$0xff] 1e+30
          %565 = vst [vmem:[%s352 + $0x620] sm:$0xff] 1e+30
          %566 = vst [vmem:[%s352 + $0x628] sm:$0xff] 1e+30
          %567 = vst [vmem:[%s352 + $0x630] sm:$0xff] 1e+30
          %568 = vst [vmem:[%s352 + $0x638] sm:$0xff] 1e+30
          %569 = vst [vmem:[%s352 + $0x640] sm:$0xff] 1e+30
          %570 = vst [vmem:[%s352 + $0x648] sm:$0xff] 1e+30
          %571 = vst [vmem:[%s352 + $0x650] sm:$0xff] 1e+30
          %572 = vst [vmem:[%s352 + $0x658] sm:$0xff] 1e+30
          %573 = vst [vmem:[%s352 + $0x660] sm:$0xff] 1e+30
          %574 = vst [vmem:[%s352 + $0x668] sm:$0xff] 1e+30
          %575 = vst [vmem:[%s352 + $0x670] sm:$0xff] 1e+30
          %576 = vst [vmem:[%s352 + $0x678] sm:$0xff] 1e+30
          %577 = vst [vmem:[%s352 + $0x680] sm:$0xff] 1e+30
          %578 = vst [vmem:[%s352 + $0x688] sm:$0xff] 1e+30
          %579 = vst [vmem:[%s352 + $0x690] sm:$0xff] 1e+30
          %580 = vst [vmem:[%s352 + $0x698] sm:$0xff] 1e+30
          %581 = vst [vmem:[%s352 + $0x6a0] sm:$0xff] 1e+30
          %582 = vst [vmem:[%s352 + $0x6a8] sm:$0xff] 1e+30
          %583 = vst [vmem:[%s352 + $0x6b0] sm:$0xff] 1e+30
          %584 = vst [vmem:[%s352 + $0x6b8] sm:$0xff] 1e+30
          %585 = vst [vmem:[%s352 + $0x6c0] sm:$0xff] 1e+30
          %586 = vst [vmem:[%s352 + $0x6c8] sm:$0xff] 1e+30
          %587 = vst [vmem:[%s352 + $0x6d0] sm:$0xff] 1e+30
          %588 = vst [vmem:[%s352 + $0x6d8] sm:$0xff] 1e+30
          %589 = vst [vmem:[%s352 + $0x6e0] sm:$0xff] 1e+30
          %590 = vst [vmem:[%s352 + $0x6e8] sm:$0xff] 1e+30
          %591 = vst [vmem:[%s352 + $0x6f0] sm:$0xff] 1e+30
          %592 = vst [vmem:[%s352 + $0x6f8] sm:$0xff] 1e+30
          %593 = vst [vmem:[%s352 + $0x700] sm:$0xff] 1e+30
          %594 = vst [vmem:[%s352 + $0x708] sm:$0xff] 1e+30
          %595 = vst [vmem:[%s352 + $0x710] sm:$0xff] 1e+30
          %596 = vst [vmem:[%s352 + $0x718] sm:$0xff] 1e+30
          %597 = vst [vmem:[%s352 + $0x720] sm:$0xff] 1e+30
          %598 = vst [vmem:[%s352 + $0x728] sm:$0xff] 1e+30
          %599 = vst [vmem:[%s352 + $0x730] sm:$0xff] 1e+30
          %600 = vst [vmem:[%s352 + $0x738] sm:$0xff] 1e+30
          %601 = vst [vmem:[%s352 + $0x740] sm:$0xff] 1e+30
          %602 = vst [vmem:[%s352 + $0x748] sm:$0xff] 1e+30
          %603 = vst [vmem:[%s352 + $0x750] sm:$0xff] 1e+30
          %604 = vst [vmem:[%s352 + $0x758] sm:$0xff] 1e+30
          %605 = vst [vmem:[%s352 + $0x760] sm:$0xff] 1e+30
          %606 = vst [vmem:[%s352 + $0x768] sm:$0xff] 1e+30
          %607 = vst [vmem:[%s352 + $0x770] sm:$0xff] 1e+30
          %608 = vst [vmem:[%s352 + $0x778] sm:$0xff] 1e+30
          %609 = vst [vmem:[%s352 + $0x780] sm:$0xff] 1e+30
          %610 = vst [vmem:[%s352 + $0x788] sm:$0xff] 1e+30
          %611 = vst [vmem:[%s352 + $0x790] sm:$0xff] 1e+30
          %612 = vst [vmem:[%s352 + $0x798] sm:$0xff] 1e+30
          %613 = vst [vmem:[%s352 + $0x7a0] sm:$0xff] 1e+30
          %614 = vst [vmem:[%s352 + $0x7a8] sm:$0xff] 1e+30
          %615 = vst [vmem:[%s352 + $0x7b0] sm:$0xff] 1e+30
          %616 = vst [vmem:[%s352 + $0x7b8] sm:$0xff] 1e+30
          %617 = vst [vmem:[%s352 + $0x7c0] sm:$0xff] 1e+30
          %618 = vst [vmem:[%s352 + $0x7c8] sm:$0xff] 1e+30
          %619 = vst [vmem:[%s352 + $0x7d0] sm:$0xff] 1e+30
          %620 = vst [vmem:[%s352 + $0x7d8] sm:$0xff] 1e+30
          %621 = vst [vmem:[%s352 + $0x7e0] sm:$0xff] 1e+30
          %622 = vst [vmem:[%s352 + $0x7e8] sm:$0xff] 1e+30
          %623 = vst [vmem:[%s352 + $0x7f0] sm:$0xff] 1e+30
          %624 = vst [vmem:[%s352 + $0x7f8] sm:$0xff] 1e+30
        $region48: #{tpu_custom_call.1} parent=31 // pred_fallthru
          _
        %v625 = vld [vmem:[%s295] sm:$0xff]
        %v626 = vld [vmem:[%s304] sm:$0xff]
        %vm627 = vcmp.ge.f32.partialorder %v625, 0.001
        %vm628 = vcmp.ge.f32.partialorder %v626, 0.001
        %vm629 = vmand %vm627, %vm628
        %v630 = vsel %vm629, 1, 0
        %v631 = vcvt.s32.f32 %v630
        %v632 = vmul.f32 %v625, %v631
        %v633 = vadd.f32 %v632, 1e-05
        %v634 = vlog2.pop %v633
        %v635 = vmul.f32 %v634, 0.6931472
        %v636 = vmul.f32 %v626, %v631
        %v637 = vadd.f32 %v636, 1e-05
        %v638 = vlog2.pop %v637
        %v639 = vmul.f32 %v638, 0.6931472
        %v640 = vsub.f32 %v635, %v639
        %v641 = vadd.f32 %v640, 0.0
        %v642 = vmul.f32 %v640, %v640
        %v643 = vadd.f32 %v642, 0.0
        %s644 = scalar_lea.vmem %s295, 8 [#allocation4]
        %v645 = vld [vmem:[%s644] sm:$0xff]
        %s646 = scalar_lea.vmem %s304, 8 [#allocation7]
        %v647 = vld [vmem:[%s646] sm:$0xff]
        %vm648 = vcmp.ge.f32.partialorder %v645, 0.001
        %vm649 = vcmp.ge.f32.partialorder %v647, 0.001
        %vm650 = vmand %vm648, %vm649
        %v651 = vsel %vm650, 1, 0
        %v652 = vcvt.s32.f32 %v651
        %v653 = vmul.f32 %v645, %v652
        %v654 = vadd.f32 %v653, 1e-05
        %v655 = vlog2.pop %v654
        %v656 = vmul.f32 %v655, 0.6931472
        %v657 = vmul.f32 %v647, %v652
        %v658 = vadd.f32 %v657, 1e-05
        %v659 = vlog2.pop %v658
        %v660 = vmul.f32 %v659, 0.6931472
        %v661 = vsub.f32 %v656, %v660
        %v662 = vadd.f32 %v641, %v661
        %v663 = vmul.f32 %v661, %v661
        %v664 = vadd.f32 %v643, %v663
        %s665 = scalar_lea.vmem %s295, 16 [#allocation4]
        %v666 = vld [vmem:[%s665] sm:$0xff]
        %s667 = scalar_lea.vmem %s304, 16 [#allocation7]
        %v668 = vld [vmem:[%s667] sm:$0xff]
        %vm669 = vcmp.ge.f32.partialorder %v666, 0.001
        %vm670 = vcmp.ge.f32.partialorder %v668, 0.001
        %vm671 = vmand %vm669, %vm670
        %v672 = vsel %vm671, 1, 0
        %v673 = vcvt.s32.f32 %v672
        %v674 = vmul.f32 %v666, %v673
        %v675 = vadd.f32 %v674, 1e-05
        %v676 = vlog2.pop %v675
        %v677 = vmul.f32 %v676, 0.6931472
        %v678 = vmul.f32 %v668, %v673
        %v679 = vadd.f32 %v678, 1e-05
        %v680 = vlog2.pop %v679
        %v681 = vmul.f32 %v680, 0.6931472
        %v682 = vsub.f32 %v677, %v681
        %v683 = vadd.f32 %v662, %v682
        %v684 = vmul.f32 %v682, %v682
        %v685 = vadd.f32 %v664, %v684
        %s686 = scalar_lea.vmem %s295, 24 [#allocation4]
        %v687 = vld [vmem:[%s686] sm:$0xff]
        %s688 = scalar_lea.vmem %s304, 24 [#allocation7]
        %v689 = vld [vmem:[%s688] sm:$0xff]
        %vm690 = vcmp.ge.f32.partialorder %v687, 0.001
        %vm691 = vcmp.ge.f32.partialorder %v689, 0.001
        %vm692 = vmand %vm690, %vm691
        %v693 = vsel %vm692, 1, 0
        %v694 = vcvt.s32.f32 %v693
        %v695 = vmul.f32 %v687, %v694
        %v696 = vadd.f32 %v695, 1e-05
        %v697 = vlog2.pop %v696
        %v698 = vmul.f32 %v697, 0.6931472
        %v699 = vmul.f32 %v689, %v694
        %v700 = vadd.f32 %v699, 1e-05
        %v701 = vlog2.pop %v700
        %v702 = vmul.f32 %v701, 0.6931472
        %v703 = vsub.f32 %v698, %v702
        %v704 = vadd.f32 %v683, %v703
        %v705 = vmul.f32 %v703, %v703
        %v706 = vadd.f32 %v685, %v705
        %s707 = scalar_lea.vmem %s295, 32 [#allocation4]
        %v708 = vld [vmem:[%s707] sm:$0xff]
        %s709 = scalar_lea.vmem %s304, 32 [#allocation7]
        %v710 = vld [vmem:[%s709] sm:$0xff]
        %vm711 = vcmp.ge.f32.partialorder %v708, 0.001
        %vm712 = vcmp.ge.f32.partialorder %v710, 0.001
        %vm713 = vmand %vm711, %vm712
        %v714 = vsel %vm713, 1, 0
        %v715 = vcvt.s32.f32 %v714
        %v716 = vmul.f32 %v708, %v715
        %v717 = vadd.f32 %v716, 1e-05
        %v718 = vlog2.pop %v717
        %v719 = vmul.f32 %v718, 0.6931472
        %v720 = vmul.f32 %v710, %v715
        %v721 = vadd.f32 %v720, 1e-05
        %v722 = vlog2.pop %v721
        %v723 = vmul.f32 %v722, 0.6931472
        %v724 = vsub.f32 %v719, %v723
        %v725 = vadd.f32 %v704, %v724
        %v726 = vmul.f32 %v724, %v724
        %v727 = vadd.f32 %v706, %v726
        %s728 = scalar_lea.vmem %s295, 40 [#allocation4]
        %v729 = vld [vmem:[%s728] sm:$0xff]
        %s730 = scalar_lea.vmem %s304, 40 [#allocation7]
        %v731 = vld [vmem:[%s730] sm:$0xff]
        %vm732 = vcmp.ge.f32.partialorder %v729, 0.001
        %vm733 = vcmp.ge.f32.partialorder %v731, 0.001
        %vm734 = vmand %vm732, %vm733
        %v735 = vsel %vm734, 1, 0
        %v736 = vcvt.s32.f32 %v735
        %v737 = vmul.f32 %v729, %v736
        %v738 = vadd.f32 %v737, 1e-05
        %v739 = vlog2.pop %v738
        %v740 = vmul.f32 %v739, 0.6931472
        %v741 = vmul.f32 %v731, %v736
        %v742 = vadd.f32 %v741, 1e-05
        %v743 = vlog2.pop %v742
        %v744 = vmul.f32 %v743, 0.6931472
        %v745 = vsub.f32 %v740, %v744
        %v746 = vadd.f32 %v725, %v745
        %v747 = vmul.f32 %v745, %v745
        %v748 = vadd.f32 %v727, %v747
        %s749 = scalar_lea.vmem %s295, 48 [#allocation4]
        %v750 = vld [vmem:[%s749] sm:$0xff]
        %s751 = scalar_lea.vmem %s304, 48 [#allocation7]
        %v752 = vld [vmem:[%s751] sm:$0xff]
        %vm753 = vcmp.ge.f32.partialorder %v750, 0.001
        %vm754 = vcmp.ge.f32.partialorder %v752, 0.001
        %vm755 = vmand %vm753, %vm754
        %v756 = vsel %vm755, 1, 0
        %v757 = vcvt.s32.f32 %v756
        %v758 = vmul.f32 %v750, %v757
        %v759 = vadd.f32 %v758, 1e-05
        %v760 = vlog2.pop %v759
        %v761 = vmul.f32 %v760, 0.6931472
        %v762 = vmul.f32 %v752, %v757
        %v763 = vadd.f32 %v762, 1e-05
        %v764 = vlog2.pop %v763
        %v765 = vmul.f32 %v764, 0.6931472
        %v766 = vsub.f32 %v761, %v765
        %v767 = vadd.f32 %v746, %v766
        %v768 = vmul.f32 %v766, %v766
        %v769 = vadd.f32 %v748, %v768
        %s770 = scalar_lea.vmem %s295, 56 [#allocation4]
        %v771 = vld [vmem:[%s770] sm:$0xff]
        %s772 = scalar_lea.vmem %s304, 56 [#allocation7]
        %v773 = vld [vmem:[%s772] sm:$0xff]
        %vm774 = vcmp.ge.f32.partialorder %v771, 0.001
        %vm775 = vcmp.ge.f32.partialorder %v773, 0.001
        %vm776 = vmand %vm774, %vm775
        %v777 = vsel %vm776, 1, 0
        %v778 = vcvt.s32.f32 %v777
        %v779 = vmul.f32 %v771, %v778
        %v780 = vadd.f32 %v779, 1e-05
        %v781 = vlog2.pop %v780
        %v782 = vmul.f32 %v781, 0.6931472
        %v783 = vmul.f32 %v773, %v778
        %v784 = vadd.f32 %v783, 1e-05
        %v785 = vlog2.pop %v784
        %v786 = vmul.f32 %v785, 0.6931472
        %v787 = vsub.f32 %v782, %v786
        %v788 = vadd.f32 %v767, %v787
        %v789 = vmul.f32 %v787, %v787
        %v790 = vadd.f32 %v769, %v789
        %v791 = vsel %vm628, 1, 0
        %v792 = vcvt.s32.f32 %v791
        %v793 = vsel %vm649, 1, 0
        %v794 = vcvt.s32.f32 %v793
        %v795 = vsel %vm670, 1, 0
        %v796 = vcvt.s32.f32 %v795
        %v797 = vsel %vm691, 1, 0
        %v798 = vcvt.s32.f32 %v797
        %v799 = vsel %vm712, 1, 0
        %v800 = vcvt.s32.f32 %v799
        %v801 = vsel %vm733, 1, 0
        %v802 = vcvt.s32.f32 %v801
        %v803 = vsel %vm754, 1, 0
        %v804 = vcvt.s32.f32 %v803
        %v805 = vsel %vm775, 1, 0
        %v806 = vcvt.s32.f32 %v805
        %v807 = vsel %vm628, %v626, -1e+09
        %v808 = vsel %vm649, %v647, -1e+09
        %v809 = vsel %vm670, %v668, -1e+09
        %v810 = vsel %vm691, %v689, -1e+09
        %v811 = vsel %vm712, %v710, -1e+09
        %v812 = vsel %vm733, %v731, -1e+09
        %v813 = vsel %vm754, %v752, -1e+09
        %v814 = vsel %vm775, %v773, -1e+09
        loop: start=0, step=1, limit=128
        $region49: #{tpu_custom_call.1} parent=31 // loop_pre_header
          _
        $region50: #{tpu_custom_call.1} parent=31 // loop_header
          %s816 = sphi 0, %s820
          %p817 = scmp.ge.s32.totalorder %s816, 128
          %v821 = vphi 1e+30, %v840
          %v822 = vphi 1e+30, %v844
          %v823 = vphi 1e+30, %v848
          %v824 = vphi 1e+30, %v852
          %v825 = vphi 1e+30, %v856
          %v826 = vphi 1e+30, %v860
          %v827 = vphi 1e+30, %v864
          %v828 = vphi 1e+30, %v868
        $region51: #{tpu_custom_call.1} parent=31 // loop_header_branch
          %819 = sbr.rel (%p817) target = $region55
        $region52: #{tpu_custom_call.1} parent=31 // loop_body
          %s829 = sshra.s32 %s816, 7
          %s830 = sand.u32 %s816, 127
          %s831 = sadd.s32 %s829, %s38
          %s832 = smul.u32 %s831, 128
          %s833 = sshra.s32 %s816, 7
          %s834 = sand.u32 %s816, 127
          %s835 = sadd.s32 %s832, %s834
          %s836 = sld [smem:[#allocation3 + %s835]]
          %v837 = vstv %s836
          %v838 = vsub.f32 %v837, %v807
          %v839 = vmul.f32 %v838, %v838
          %v840 = vmin.f32 %v821, %v839
          %v841 = vsub.f32 %v837, %v808
          %v842 = vmul.f32 %v841, %v841
          %v843 = vmin.f32 %v839, %v842
          %v844 = vmin.f32 %v822, %v842
          %v845 = vsub.f32 %v837, %v809
          %v846 = vmul.f32 %v845, %v845
          %v847 = vmin.f32 %v843, %v846
          %v848 = vmin.f32 %v823, %v846
          %v849 = vsub.f32 %v837, %v810
          %v850 = vmul.f32 %v849, %v849
          %v851 = vmin.f32 %v847, %v850
          %v852 = vmin.f32 %v824, %v850
          %v853 = vsub.f32 %v837, %v811
          %v854 = vmul.f32 %v853, %v853
          %v855 = vmin.f32 %v851, %v854
          %v856 = vmin.f32 %v825, %v854
          %v857 = vsub.f32 %v837, %v812
          %v858 = vmul.f32 %v857, %v857
          %v859 = vmin.f32 %v855, %v858
          %v860 = vmin.f32 %v826, %v858
          %v861 = vsub.f32 %v837, %v813
          %v862 = vmul.f32 %v861, %v861
          %v863 = vmin.f32 %v859, %v862
          %v864 = vmin.f32 %v827, %v862
          %v865 = vsub.f32 %v837, %v814
          %v866 = vmul.f32 %v865, %v865
          %v867 = vmin.f32 %v863, %v866
          %v868 = vmin.f32 %v828, %v866
          %s869 = smul.u32 %s816, 8
          %s870 = scalar_lea.vmem %s352, %s869 [#allocation11]
          %v871 = vld [vmem:[%s870] sm:$0xff]
          %v872 = vmin.f32 %v871, %v867
          %873 = vst [vmem:[%s870] sm:$0xff] %v872
        $region53: #{tpu_custom_call.1} parent=31 // loop_footer
          %s820 = sadd.s32 1, %s816
        $region54: #{tpu_custom_call.1} parent=31 // loop_footer_branch
          %815 = sbr.rel target = $region50
        $region55: #{tpu_custom_call.1} parent=31 // loop_exit
          _
        %v874 = vmul.f32 %v821, %v792
        %v875 = vadd.f32 %v874, 0.0
        %v876 = vadd.f32 %v792, 0.0
        %v877 = vmul.f32 %v822, %v794
        %v878 = vadd.f32 %v875, %v877
        %v879 = vadd.f32 %v876, %v794
        %v880 = vmul.f32 %v823, %v796
        %v881 = vadd.f32 %v878, %v880
        %v882 = vadd.f32 %v879, %v796
        %v883 = vmul.f32 %v824, %v798
        %v884 = vadd.f32 %v881, %v883
        %v885 = vadd.f32 %v882, %v798
        %v886 = vmul.f32 %v825, %v800
        %v887 = vadd.f32 %v884, %v886
        %v888 = vadd.f32 %v885, %v800
        %v889 = vmul.f32 %v826, %v802
        %v890 = vadd.f32 %v887, %v889
        %v891 = vadd.f32 %v888, %v802
        %v892 = vmul.f32 %v827, %v804
        %v893 = vadd.f32 %v890, %v892
        %v894 = vadd.f32 %v891, %v804
        %v895 = vmul.f32 %v828, %v806
        %v896 = vadd.f32 %v893, %v895
        %v897 = vadd.f32 %v894, %v806
        %v898 = vld [vmem:[%s313] sm:$0xff]
        %s899 = scalar_lea.vmem %s313, 8 [#allocation9]
        %v900 = vld [vmem:[%s899] sm:$0xff]
        %s901 = scalar_lea.vmem %s313, 16 [#allocation9]
        %v902 = vld [vmem:[%s901] sm:$0xff]
        %s903 = scalar_lea.vmem %s313, 24 [#allocation9]
        %v904 = vld [vmem:[%s903] sm:$0xff]
        %s905 = scalar_lea.vmem %s313, 32 [#allocation9]
        %v906 = vld [vmem:[%s905] sm:$0xff]
        %s907 = scalar_lea.vmem %s313, 40 [#allocation9]
        %v908 = vld [vmem:[%s907] sm:$0xff]
        %s909 = scalar_lea.vmem %s313, 48 [#allocation9]
        %v910 = vld [vmem:[%s909] sm:$0xff]
        %s911 = scalar_lea.vmem %s313, 56 [#allocation9]
        %v912 = vld [vmem:[%s911] sm:$0xff]
        %vm913 = vcmp.ge.f32.partialorder %v898, 0.001
        %v914 = vsel %vm913, 1, 0
        %v915 = vcvt.s32.f32 %v914
        %vm916 = vcmp.ge.f32.partialorder %v900, 0.001
        %v917 = vsel %vm916, 1, 0
        %v918 = vcvt.s32.f32 %v917
        %vm919 = vcmp.ge.f32.partialorder %v902, 0.001
        %v920 = vsel %vm919, 1, 0
        %v921 = vcvt.s32.f32 %v920
        %vm922 = vcmp.ge.f32.partialorder %v904, 0.001
        %v923 = vsel %vm922, 1, 0
        %v924 = vcvt.s32.f32 %v923
        %vm925 = vcmp.ge.f32.partialorder %v906, 0.001
        %v926 = vsel %vm925, 1, 0
        %v927 = vcvt.s32.f32 %v926
        %vm928 = vcmp.ge.f32.partialorder %v908, 0.001
        %v929 = vsel %vm928, 1, 0
        %v930 = vcvt.s32.f32 %v929
        %vm931 = vcmp.ge.f32.partialorder %v910, 0.001
        %v932 = vsel %vm931, 1, 0
        %v933 = vcvt.s32.f32 %v932
        %vm934 = vcmp.ge.f32.partialorder %v912, 0.001
        %v935 = vsel %vm934, 1, 0
        %v936 = vcvt.s32.f32 %v935
        %v937 = vsel %vm913, %v898, -1e+09
        %v938 = vsel %vm916, %v900, -1e+09
        %v939 = vsel %vm919, %v902, -1e+09
        %v940 = vsel %vm922, %v904, -1e+09
        %v941 = vsel %vm925, %v906, -1e+09
        %v942 = vsel %vm928, %v908, -1e+09
        %v943 = vsel %vm931, %v910, -1e+09
        %v944 = vsel %vm934, %v912, -1e+09
        loop: start=0, step=1, limit=128
        $region56: #{tpu_custom_call.1} parent=31 // loop_pre_header
          _
        $region57: #{tpu_custom_call.1} parent=31 // loop_header
          %s946 = sphi 0, %s950
          %p947 = scmp.ge.s32.totalorder %s946, 128
          %v951 = vphi 1e+30, %v970
          %v952 = vphi 1e+30, %v974
          %v953 = vphi 1e+30, %v978
          %v954 = vphi 1e+30, %v982
          %v955 = vphi 1e+30, %v986
          %v956 = vphi 1e+30, %v990
          %v957 = vphi 1e+30, %v994
          %v958 = vphi 1e+30, %v998
        $region58: #{tpu_custom_call.1} parent=31 // loop_header_branch
          %949 = sbr.rel (%p947) target = $region62
        $region59: #{tpu_custom_call.1} parent=31 // loop_body
          %s959 = sshra.s32 %s946, 7
          %s960 = sand.u32 %s946, 127
          %s961 = sadd.s32 %s959, %s38
          %s962 = smul.u32 %s961, 128
          %s963 = sshra.s32 %s946, 7
          %s964 = sand.u32 %s946, 127
          %s965 = sadd.s32 %s962, %s964
          %s966 = sld [smem:[#allocation3 + %s965]]
          %v967 = vstv %s966
          %v968 = vsub.f32 %v967, %v937
          %v969 = vmul.f32 %v968, %v968
          %v970 = vmin.f32 %v951, %v969
          %v971 = vsub.f32 %v967, %v938
          %v972 = vmul.f32 %v971, %v971
          %v973 = vmin.f32 %v969, %v972
          %v974 = vmin.f32 %v952, %v972
          %v975 = vsub.f32 %v967, %v939
          %v976 = vmul.f32 %v975, %v975
          %v977 = vmin.f32 %v973, %v976
          %v978 = vmin.f32 %v953, %v976
          %v979 = vsub.f32 %v967, %v940
          %v980 = vmul.f32 %v979, %v979
          %v981 = vmin.f32 %v977, %v980
          %v982 = vmin.f32 %v954, %v980
          %v983 = vsub.f32 %v967, %v941
          %v984 = vmul.f32 %v983, %v983
          %v985 = vmin.f32 %v981, %v984
          %v986 = vmin.f32 %v955, %v984
          %v987 = vsub.f32 %v967, %v942
          %v988 = vmul.f32 %v987, %v987
          %v989 = vmin.f32 %v985, %v988
          %v990 = vmin.f32 %v956, %v988
          %v991 = vsub.f32 %v967, %v943
          %v992 = vmul.f32 %v991, %v991
          %v993 = vmin.f32 %v989, %v992
          %v994 = vmin.f32 %v957, %v992
          %v995 = vsub.f32 %v967, %v944
          %v996 = vmul.f32 %v995, %v995
          %v997 = vmin.f32 %v993, %v996
          %v998 = vmin.f32 %v958, %v996
          %s999 = sadd.s32 %s946, 128
          %s1000 = smul.u32 %s999, 8
          %s1001 = scalar_lea.vmem %s352, %s1000 [#allocation11]
          %v1002 = vld [vmem:[%s1001] sm:$0xff]
          %v1003 = vmin.f32 %v1002, %v997
          %1004 = vst [vmem:[%s1001] sm:$0xff] %v1003
        $region60: #{tpu_custom_call.1} parent=31 // loop_footer
          %s950 = sadd.s32 1, %s946
        $region61: #{tpu_custom_call.1} parent=31 // loop_footer_branch
          %945 = sbr.rel target = $region57
        $region62: #{tpu_custom_call.1} parent=31 // loop_exit
          _
        %v1005 = vmul.f32 %v951, %v915
        %v1006 = vadd.f32 %v1005, 0.0
        %v1007 = vadd.f32 %v915, 0.0
        %v1008 = vmul.f32 %v952, %v918
        %v1009 = vadd.f32 %v1006, %v1008
        %v1010 = vadd.f32 %v1007, %v918
        %v1011 = vmul.f32 %v953, %v921
        %v1012 = vadd.f32 %v1009, %v1011
        %v1013 = vadd.f32 %v1010, %v921
        %v1014 = vmul.f32 %v954, %v924
        %v1015 = vadd.f32 %v1012, %v1014
        %v1016 = vadd.f32 %v1013, %v924
        %v1017 = vmul.f32 %v955, %v927
        %v1018 = vadd.f32 %v1015, %v1017
        %v1019 = vadd.f32 %v1016, %v927
        %v1020 = vmul.f32 %v956, %v930
        %v1021 = vadd.f32 %v1018, %v1020
        %v1022 = vadd.f32 %v1019, %v930
        %v1023 = vmul.f32 %v957, %v933
        %v1024 = vadd.f32 %v1021, %v1023
        %v1025 = vadd.f32 %v1022, %v933
        %v1026 = vmul.f32 %v958, %v936
        %v1027 = vadd.f32 %v1024, %v1026
        %v1028 = vadd.f32 %v1025, %v936
        %v1029 = vld [vmem:[%s345] sm:$0xff]
        %v1030 = vadd.f32 %v1029, %v788
        %1031 = vst [vmem:[%s345] sm:$0xff] %v1030
        %s1032 = scalar_lea.vmem %s345, 8 [#allocation10]
        %v1033 = vld [vmem:[%s1032] sm:$0xff]
        %v1034 = vadd.f32 %v1033, %v790
        %1035 = vst [vmem:[%s1032] sm:$0xff] %v1034
        %s1036 = scalar_lea.vmem %s345, 16 [#allocation10]
        %v1037 = vld [vmem:[%s1036] sm:$0xff]
        %v1038 = vadd.f32 %v1037, %v896
        %1039 = vst [vmem:[%s1036] sm:$0xff] %v1038
        %s1040 = scalar_lea.vmem %s345, 24 [#allocation10]
        %v1041 = vld [vmem:[%s1040] sm:$0xff]
        %v1042 = vadd.f32 %v1041, %v897
        %1043 = vst [vmem:[%s1040] sm:$0xff] %v1042
        %s1044 = scalar_lea.vmem %s345, 32 [#allocation10]
        %v1045 = vld [vmem:[%s1044] sm:$0xff]
        %v1046 = vadd.f32 %v1045, %v1027
        %1047 = vst [vmem:[%s1044] sm:$0xff] %v1046
        %s1048 = scalar_lea.vmem %s345, 40 [#allocation10]
        %v1049 = vld [vmem:[%s1048] sm:$0xff]
        %v1050 = vadd.f32 %v1049, %v1028
        %1051 = vst [vmem:[%s1048] sm:$0xff] %v1050
        %s1052 = sand.u32 %s152, 1
        %s1053 = scalar_lea.sflag [#allocation6], %s1052
        %s1054 = sand.u32 %s152, 1
        %s1055 = smul.addr %s1054, 48
        %s1056 = scalar_lea.vmem [#allocation10], %s1055
        %s1057 = sand.u32 %s180, 1
        %s1058 = scalar_lea.sflag [#allocation12], %s1057
        %s1059 = sand.u32 %s180, 1
        %s1060 = smul.addr %s1059, 2048
        %s1061 = scalar_lea.vmem [#allocation11], %s1060
        // Predicated region
        $region63: #{tpu_custom_call.1} parent=31 // pred_check
          %p1062 = pneg %p162
        $region64: #{tpu_custom_call.1} parent=31 // pred_check_branch
          %1064 = sbr.rel (%p1062) target = $region66
        $region65: #{tpu_custom_call.1} parent=31 // pred_region
          %s1066 = ssub.s32 768, 768
          %1067 = vsyncadd %s1053, %s1066
          %s1068 = smul.addr %s39, 6
          %s1069 = smul.addr %s38, 6
          %s1070 = sadd.s32 %s1068, %s1069
          %s1071 = smul.addr %s1070, 128
          %s1072 = scalar_lea.hbm %s4, %s1071
          %s1073 = sshll.u32 %s1056, 4
          %s1074 = int_to_ptr.vmem [resolvable:$true] %s1073
          %1079 = dma.vmem_to_hbm [thread:$0]  %s1074, 768, %s1072, %s1053, 128, 128, 8
        $region66: #{tpu_custom_call.1} parent=31 // pred_fallthru
          _
        // Predicated region
        $region67: #{tpu_custom_call.1} parent=31 // pred_check
          %p1080 = pneg %p190
        $region68: #{tpu_custom_call.1} parent=31 // pred_check_branch
          %1082 = sbr.rel (%p1080) target = $region70
        $region69: #{tpu_custom_call.1} parent=31 // pred_region
          %s1084 = ssub.s32 32768, 32768
          %1085 = vsyncadd %s1058, %s1084
          %s1086 = smul.addr %s39, 256
          %s1087 = smul.addr %s38, 256
          %s1088 = sadd.s32 %s1086, %s1087
          %s1089 = smul.addr %s1088, 128
          %s1090 = scalar_lea.hbm %s5, %s1089
          %s1091 = sshll.u32 %s1061, 4
          %s1092 = int_to_ptr.vmem [resolvable:$true] %s1091
          %1097 = dma.vmem_to_hbm [thread:$0]  %s1092, 32768, %s1090, %s1058, 128, 128, 8
        $region70: #{tpu_custom_call.1} parent=31 // pred_fallthru
          _
      $region32: #{tpu_custom_call.1} parent=5 // pred_fallthru
        _
      %p1098 = scmp.le.s32.totalorder 2, %s28
      // Predicated region
      $region71: #{tpu_custom_call.1} parent=5 // pred_check
        %p1099 = pneg %p1098
      $region72: #{tpu_custom_call.1} parent=5 // pred_check_branch
        %1101 = sbr.rel (%p1099) target = $region74
      $region73: #{tpu_custom_call.1} parent=5 // pred_region
        %s1102 = ssub.s32 %s28, 2
        // Predicated region
        $region75: #{tpu_custom_call.1} parent=73 // pred_check
          %p1103 = pneg %p168
        $region76: #{tpu_custom_call.1} parent=73 // pred_check_branch
          %1105 = sbr.rel (%p1103) target = $region78
        $region77: #{tpu_custom_call.1} parent=73 // pred_region
          %s1106 = sand.u32 %s153, 1
          %s1107 = scalar_lea.sflag [#allocation6], %s1106
          %s1108 = sand.u32 %s153, 1
          %s1109 = smul.addr %s1108, 48
          %s1110 = scalar_lea.vmem [#allocation10], %s1109
          %1111 = dma.done %s1107, 768
        $region78: #{tpu_custom_call.1} parent=73 // pred_fallthru
          _
        // Predicated region
        $region79: #{tpu_custom_call.1} parent=73 // pred_check
          %p1112 = pneg %p196
        $region80: #{tpu_custom_call.1} parent=73 // pred_check_branch
          %1114 = sbr.rel (%p1112) target = $region82
        $region81: #{tpu_custom_call.1} parent=73 // pred_region
          %s1115 = sand.u32 %s181, 1
          %s1116 = scalar_lea.sflag [#allocation12], %s1115
          %s1117 = sand.u32 %s181, 1
          %s1118 = smul.addr %s1117, 2048
          %s1119 = scalar_lea.vmem [#allocation11], %s1118
          %1120 = dma.done %s1116, 32768
        $region82: #{tpu_custom_call.1} parent=73 // pred_fallthru
          _
      $region74: #{tpu_custom_call.1} parent=5 // pred_fallthru
        _
    $region6: #{tpu_custom_call.1} parent=1 // loop_footer
      %s32 = sadd.s32 1, %s28
    $region7: #{tpu_custom_call.1} parent=1 // loop_footer_branch
      %27 = sbr.rel target = $region3
    $region8: #{tpu_custom_call.1} parent=1 // loop_exit
      _
    %1121 = vsyncpa [#allocation5], 1
    %s1122 = scalar_lea.sflag [#allocation5], 1
    %1123 = vsyncpa %s1122, 1
    %1124 = vsyncpa [#allocation8], 1
    %s1125 = scalar_lea.sflag [#allocation8], 1
    %1126 = vsyncpa %s1125, 1
    %1127 = vsyncpa [#allocation6], 1
    %s1128 = scalar_lea.sflag [#allocation6], 1
    %1129 = vsyncpa %s1128, 1
    %1130 = vsyncpa [#allocation12], 1
    %s1131 = scalar_lea.sflag [#allocation12], 1
    %1132 = vsyncpa %s1131, 1

</llo_original>
